<compile_context>
chip_gen: v5e
topology: v5e:2x2
jax: 0.10.0
libtpu: 0.0.40
codegen_flags: <defaults>
</compile_context>

<pallas_src>
import functools

import jax
import jax.numpy as jnp
import numpy as np
from jax import lax
from jax.experimental import pallas as pl
from jax.experimental.pallas import tpu as pltpu

# module-level constants from train.py
n_embd = 256
n_head = 6
block_size = 256
head_size = n_embd // n_head          # 42
half_dim = head_size // 2             # 21

LANE = 128                            # lane-tile width each fused segment is padded to


def head_kernel(x_ref, w_ref, cs_ref, sn_ref, o_ref, *, hs):
    """One block of Bt batch elements per grid step.

    x_ref : (Bt, T, C)   f32 input tokens (cast to bf16 in-kernel)
    w_ref : (C, 5*LANE)  bf16 fused weights [q_a | q_b | k_a | k_b | v], each
                         segment zero-padded to 128 lanes; RoPE swap/sign and the
                         C**-0.5 score scale already folded in.
    cs/sn : (T, LANE)    f32 rotary tables (cos/sin duplicated to head width, padded)
    o_ref : (Bt, T, LANE) f32 output (columns hs.. are scratch; wrapper slices :hs)
    """
    bt, t, c = x_ref.shape

    # in-kernel f32 -> bf16 cast (cheap VPU work hidden under the pipeline)
    x = x_ref[...].astype(jnp.bfloat16)
    x2 = x.reshape(bt * t, c)

    # single fused lane-dense projection (MXU, bf16 operands, f32 accumulation)
    proj = jnp.dot(x2, w_ref[...], preferred_element_type=jnp.float32)
    proj = proj.reshape(bt, t, 5 * LANE)

    cs = cs_ref[...]                   # (T, LANE) f32, broadcast over Bt
    sn = sn_ref[...]

    # vreg-lane-aligned, zero-cost views of the projection
    q_a = proj[..., 0 * LANE:1 * LANE]
    q_b = proj[..., 1 * LANE:2 * LANE]
    k_a = proj[..., 2 * LANE:3 * LANE]
    k_b = proj[..., 3 * LANE:4 * LANE]
    v = proj[..., 4 * LANE:5 * LANE]

    # rotary embedding: complex multiply realized as a*cos + b*sin
    # (sign/swap folded into weight columns; score scale folded into q weights;
    #  padded lanes stay exactly zero)
    q_rot = q_a * cs + q_b * sn        # (Bt, T, LANE) f32, already * C**-0.5
    k_rot = k_a * cs + k_b * sn        # (Bt, T, LANE) f32

    # attention scores over the full padded 128-lane head dim (pad lanes are zero).
    # NOTE: the b.T here may lower to an XLU transpose; accepted (MXU/XLU have slack).
    wei = jnp.einsum('bqd,bkd->bqk',
                     q_rot.astype(jnp.bfloat16), k_rot.astype(jnp.bfloat16),
                     preferred_element_type=jnp.float32)        # (Bt, T, T) f32

    # causal mask (large finite negative, not -inf) + numerically-stable exp
    row = lax.broadcasted_iota(jnp.int32, (t, t), 0)
    col = lax.broadcasted_iota(jnp.int32, (t, t), 1)
    wei = jnp.where(col <= row, wei, jnp.float32(-1e30))
    wei = wei - jnp.max(wei, axis=-1, keepdims=True)
    p = jnp.exp(wei)                                            # unnormalized probs

    # deferred softmax normalization: inject an all-ones column at lane `hs` of the
    # zero-padded value block so the MXU computes the row-sum alongside p @ v.
    lane_idx = lax.broadcasted_iota(jnp.int32, (1, 1, LANE), 2)
    v_ext = jnp.where(lane_idx == hs, jnp.float32(1.0), v)

    out = jnp.einsum('bqk,bkd->bqd',
                     p.astype(jnp.bfloat16), v_ext.astype(jnp.bfloat16),
                     preferred_element_type=jnp.float32)        # (Bt, T, LANE) f32

    denom = out[..., hs:hs + 1]                                 # (Bt, T, 1) row sums
    # lane-dense, unmasked store; columns hs.. are scratch (sliced off by wrapper)
    o_ref[...] = out * pl.reciprocal(denom, approx=True)


def prepare_head_params(Wq, Wk, Wv, cos, sin):
    """One-time parameter prep (hoisted off the per-forward path).

    Wq/Wk/Wv: (H, C) torch nn.Linear weight layout; cos/sin: (T, H//2).
    Returns (w_fused (C, 5*LANE) bf16, cs (T, LANE) f32, sn (T, LANE) f32).
    """
    H, C = Wq.shape
    scale = float(C) ** (-0.5)

    def split(W):
        Wr = jnp.transpose(W[0::2, :])                   # (C, half) "real" columns
        Wi = jnp.transpose(W[1::2, :])                   # (C, half) "imag" columns
        a = jnp.concatenate([Wr, Wi], axis=1)            # produces [ r | i]
        b = jnp.concatenate([-Wi, Wr], axis=1)           # produces [-i | r]
        return a, b

    def pad(W):                                          # (C, H) -> (C, LANE), zero pad
        return jnp.pad(W, ((0, 0), (0, LANE - H)))

    qa, qb = split(Wq)
    ka, kb = split(Wk)
    w_fused = jnp.concatenate(
        [pad(qa * scale), pad(qb * scale), pad(ka), pad(kb), pad(jnp.transpose(Wv))],
        axis=1)                                          # (C, 5*LANE)

    cs = jnp.pad(jnp.concatenate([cos, cos], axis=1), ((0, 0), (0, LANE - H)))
    sn = jnp.pad(jnp.concatenate([sin, sin], axis=1), ((0, 0), (0, LANE - H)))
    return (w_fused.astype(jnp.bfloat16),
            cs.astype(jnp.float32), sn.astype(jnp.float32))


def _pick_bt(B):
    """Batch elements per grid step: as large as possible while keeping >=2 grid
    steps so both TensorCores get work (megacore); capped at 8 to stay well inside
    the v7x 32 MiB scoped-VMEM default at T=256."""
    if B == 1:
        return 1
    for bt in (8, 4, 2, 1):
        if B % bt == 0 and B // bt >= 2:
            return bt
    return 1


@jax.jit
def head_forward(x, w_fused, cs, sn):
    """x: (B, T, C) f32; w_fused: (C, 5*LANE) bf16; cs/sn: (T, LANE) f32
    -> (B, T, head_size) f32."""
    B, T, C = x.shape
    bt = _pick_bt(B)

    grid_spec = pltpu.PrefetchScalarGridSpec(
        num_scalar_prefetch=0,
        grid=(B // bt,),
        in_specs=[
            pl.BlockSpec((bt, T, C), lambda b: (b, 0, 0)),
            pl.BlockSpec((C, 5 * LANE), lambda b: (0, 0)),
            pl.BlockSpec((T, LANE), lambda b: (0, 0)),
            pl.BlockSpec((T, LANE), lambda b: (0, 0)),
        ],
        out_specs=pl.BlockSpec((bt, T, LANE), lambda b: (b, 0, 0)),
    )
    out = pl.pallas_call(
        functools.partial(head_kernel, hs=head_size),
        out_shape=jax.ShapeDtypeStruct((B, T, LANE), jnp.float32),
        grid_spec=grid_spec,
        compiler_params=pltpu.CompilerParams(dimension_semantics=("parallel",)),
    )(x, w_fused, cs, sn)
    # drop the denominator column and the zero padding (cheap XLA slice)
    return out[..., :head_size]


def head_reference(x, Wq, Wk, Wv, cos, sin):
    """Plain-JAX (f32) replica of the PyTorch forward, for validation."""
    B, T, C = x.shape
    q = x @ Wq.T
    k = x @ Wk.T
    v = x @ Wv.T

    def rope(t):
        tr, ti = t[..., 0::2], t[..., 1::2]
        rr = tr * cos - ti * sin
        ri = tr * sin + ti * cos
        return jnp.stack([rr, ri], axis=-1).reshape(t.shape)

    q, k = rope(q), rope(k)
    wei = (q @ jnp.swapaxes(k, -1, -2)) * (C ** (-0.5))
    tril = jnp.tril(jnp.ones((T, T), jnp.float32))
    wei = jnp.where(tril == 0, -jnp.inf, wei)
    wei = jax.nn.softmax(wei, axis=-1)
    return wei @ v


if __name__ == "__main__":
    B, T = 4, 32                       # small shapes (T <= block_size, C = n_embd)
    key = jax.random.PRNGKey(0)
    kx, kq, kk, kv = jax.random.split(key, 4)

    x = jax.random.normal(kx, (B, T, n_embd), dtype=jnp.float32)
    w_scale = 1.0 / np.sqrt(n_embd)
    Wq = jax.random.normal(kq, (head_size, n_embd), dtype=jnp.float32) * w_scale
    Wk = jax.random.normal(kk, (head_size, n_embd), dtype=jnp.float32) * w_scale
    Wv = jax.random.normal(kv, (head_size, n_embd), dtype=jnp.float32) * w_scale

    # freqs_complex = exp(i * pos * theta) -> cos/sin tables of shape (T, head_size//2)
    inv_freq = 1.0 / (10000.0 ** (jnp.arange(0, head_size, 2, dtype=jnp.float32) / head_size))
    angles = jnp.arange(T, dtype=jnp.float32)[:, None] * inv_freq[None, :]
    cos, sin = jnp.cos(angles), jnp.sin(angles)

    # one-time weight fusion / lane padding / table prep (off the per-forward path)
    w_fused, cs, sn = prepare_head_params(Wq, Wk, Wv, cos, sin)

    out = jax.block_until_ready(head_forward(x, w_fused, cs, sn))
    ref = jax.block_until_ready(head_reference(x, Wq, Wk, Wv, cos, sin))

    # bf16 MXU operands (f32 accumulation) + approx reciprocal -> loosened tolerance
    np.testing.assert_allclose(np.asarray(out), np.asarray(ref), rtol=2e-2, atol=1e-2)

    print("KERNEL_OK")
</pallas_src>

<mosaic_0001>
module attributes {stable_mosaic.version = 11 : i64} {
  func.func @head_kernel(%arg0: i32, %arg1: memref<2x32x256xf32, #tpu.memory_space<vmem>>, %arg2: memref<256x640xbf16, #tpu.memory_space<vmem>>, %arg3: memref<32x128xf32, #tpu.memory_space<vmem>>, %arg4: memref<32x128xf32, #tpu.memory_space<vmem>>, %arg5: memref<2x32x128xf32, #tpu.memory_space<vmem>>) attributes {dimension_semantics = [#tpu.dimension_semantics<parallel>], iteration_bounds = array<i64: 2>, scalar_prefetch = 0 : i64, scratch_operands = 0 : i64, tpu.core_type = #tpu.core_type<tc>, window_params = [{transform_indices = @transform_0, window_bounds = array<i64: 2, 32, 256>}, {pipeline_mode = #tpu.pipeline_mode<synchronous>, transform_indices = @transform_1, window_bounds = array<i64: 256, 640>}, {pipeline_mode = #tpu.pipeline_mode<synchronous>, transform_indices = @transform_2, window_bounds = array<i64: 32, 128>}, {pipeline_mode = #tpu.pipeline_mode<synchronous>, transform_indices = @transform_3, window_bounds = array<i64: 32, 128>}, {transform_indices = @transform_4, window_bounds = array<i64: 2, 32, 128>}]} {
    %c0 = arith.constant 0 : index
    %c0_0 = arith.constant 0 : index
    %c0_1 = arith.constant 0 : index
    %0 = vector.load %arg1[%c0, %c0_0, %c0_1] : memref<2x32x256xf32, #tpu.memory_space<vmem>>, vector<2x32x256xf32>
    %1 = arith.truncf %0 : vector<2x32x256xf32> to vector<2x32x256xbf16>
    %2 = vector.shape_cast %1 : vector<2x32x256xbf16> to vector<64x256xbf16>
    %c0_2 = arith.constant 0 : index
    %c0_3 = arith.constant 0 : index
    %3 = vector.load %arg2[%c0_2, %c0_3] : memref<256x640xbf16, #tpu.memory_space<vmem>>, vector<256x640xbf16>
    %cst = arith.constant dense<0.000000e+00> : vector<64x640xf32>
    %4 = tpu.matmul %2, %3, %cst {dimension_numbers = #tpu.dot_dimension_numbers<[1], [0], [0], [1], [0, 0, 1, 1], [], []>} : vector<64x256xbf16>, vector<256x640xbf16>, vector<64x640xf32> -> vector<64x640xf32>
    %5 = vector.shape_cast %4 : vector<64x640xf32> to vector<2x32x640xf32>
    %c0_4 = arith.constant 0 : index
    %c0_5 = arith.constant 0 : index
    %6 = vector.load %arg3[%c0_4, %c0_5] : memref<32x128xf32, #tpu.memory_space<vmem>>, vector<32x128xf32>
    %c0_6 = arith.constant 0 : index
    %c0_7 = arith.constant 0 : index
    %7 = vector.load %arg4[%c0_6, %c0_7] : memref<32x128xf32, #tpu.memory_space<vmem>>, vector<32x128xf32>
    %8 = vector.extract_strided_slice %5 {offsets = [0, 0, 0], sizes = [2, 32, 128], strides = [1, 1, 1]} : vector<2x32x640xf32> to vector<2x32x128xf32>
    %9 = vector.extract_strided_slice %5 {offsets = [0, 0, 128], sizes = [2, 32, 128], strides = [1, 1, 1]} : vector<2x32x640xf32> to vector<2x32x128xf32>
    %10 = vector.extract_strided_slice %5 {offsets = [0, 0, 256], sizes = [2, 32, 128], strides = [1, 1, 1]} : vector<2x32x640xf32> to vector<2x32x128xf32>
    %11 = vector.extract_strided_slice %5 {offsets = [0, 0, 384], sizes = [2, 32, 128], strides = [1, 1, 1]} : vector<2x32x640xf32> to vector<2x32x128xf32>
    %12 = vector.extract_strided_slice %5 {offsets = [0, 0, 512], sizes = [2, 32, 128], strides = [1, 1, 1]} : vector<2x32x640xf32> to vector<2x32x128xf32>
    %13 = vector.shape_cast %6 : vector<32x128xf32> to vector<1x32x128xf32>
    %14 = vector.broadcast %13 : vector<1x32x128xf32> to vector<2x32x128xf32>
    %15 = arith.mulf %8, %14 : vector<2x32x128xf32>
    %16 = vector.shape_cast %7 : vector<32x128xf32> to vector<1x32x128xf32>
    %17 = vector.broadcast %16 : vector<1x32x128xf32> to vector<2x32x128xf32>
    %18 = arith.mulf %9, %17 : vector<2x32x128xf32>
    %19 = arith.addf %15, %18 : vector<2x32x128xf32>
    %20 = vector.shape_cast %6 : vector<32x128xf32> to vector<1x32x128xf32>
    %21 = vector.broadcast %20 : vector<1x32x128xf32> to vector<2x32x128xf32>
    %22 = arith.mulf %10, %21 : vector<2x32x128xf32>
    %23 = vector.shape_cast %7 : vector<32x128xf32> to vector<1x32x128xf32>
    %24 = vector.broadcast %23 : vector<1x32x128xf32> to vector<2x32x128xf32>
    %25 = arith.mulf %11, %24 : vector<2x32x128xf32>
    %26 = arith.addf %22, %25 : vector<2x32x128xf32>
    %27 = arith.truncf %19 : vector<2x32x128xf32> to vector<2x32x128xbf16>
    %28 = arith.truncf %26 : vector<2x32x128xf32> to vector<2x32x128xbf16>
    "tpu.trace_start"() <{level = 10 : i32, message = "bqd,bkd->bqk"}> : () -> ()
    %cst_8 = arith.constant dense<0.000000e+00> : vector<2x32x32xf32>
    %29 = tpu.matmul %27, %28, %cst_8 {dimension_numbers = #tpu.dot_dimension_numbers<[2], [2], [1], [1], [0, 0, 0, 1, 1, 1], [0], [0]>} : vector<2x32x128xbf16>, vector<2x32x128xbf16>, vector<2x32x32xf32> -> vector<2x32x32xf32>
    "tpu.trace_stop"() : () -> ()
    %30 = tpu.iota {dimensions = array<i32: 0>} : vector<32x32xi32>
    %31 = tpu.iota {dimensions = array<i32: 1>} : vector<32x32xi32>
    %32 = arith.cmpi sle, %31, %30 : vector<32x32xi32>
    %cst_9 = arith.constant -1.000000e+30 : f32
    %33 = vector.shape_cast %32 : vector<32x32xi1> to vector<1x32x32xi1>
    %34 = vector.broadcast %33 : vector<1x32x32xi1> to vector<2x32x32xi1>
    %35 = vector.broadcast %cst_9 : f32 to vector<2x32x32xf32>
    %36 = arith.select %34, %29, %35 : vector<2x32x32xi1>, vector<2x32x32xf32>
    %cst_10 = arith.constant dense<0xFF800000> : vector<2x32xf32>
    %37 = vector.multi_reduction <maximumf>, %36, %cst_10 [2] : vector<2x32x32xf32> to vector<2x32xf32>
    %38 = vector.shape_cast %37 : vector<2x32xf32> to vector<2x32x1xf32>
    %39 = vector.broadcast %38 : vector<2x32x1xf32> to vector<2x32x32xf32>
    %40 = arith.subf %36, %39 : vector<2x32x32xf32>
    %41 = math.exp %40 : vector<2x32x32xf32>
    %42 = tpu.iota {dimensions = array<i32: 2>} : vector<1x1x128xi32>
    %c42_i32 = arith.constant 42 : i32
    %43 = vector.broadcast %c42_i32 : i32 to vector<1x1x128xi32>
    %44 = arith.cmpi eq, %42, %43 : vector<1x1x128xi32>
    %cst_11 = arith.constant 1.000000e+00 : f32
    %45 = vector.shape_cast %44 : vector<1x1x128xi1> to vector<1x1x128xi1>
    %46 = vector.broadcast %45 : vector<1x1x128xi1> to vector<2x32x128xi1>
    %47 = vector.broadcast %cst_11 : f32 to vector<2x32x128xf32>
    %48 = arith.select %46, %47, %12 : vector<2x32x128xi1>, vector<2x32x128xf32>
    %49 = arith.truncf %41 : vector<2x32x32xf32> to vector<2x32x32xbf16>
    %50 = arith.truncf %48 : vector<2x32x128xf32> to vector<2x32x128xbf16>
    "tpu.trace_start"() <{level = 10 : i32, message = "bqk,bkd->bqd"}> : () -> ()
    %cst_12 = arith.constant dense<0.000000e+00> : vector<2x32x128xf32>
    %51 = tpu.matmul %49, %50, %cst_12 {dimension_numbers = #tpu.dot_dimension_numbers<[2], [1], [1], [2], [0, 0, 0, 1, 1, 2], [0], [0]>} : vector<2x32x32xbf16>, vector<2x32x128xbf16>, vector<2x32x128xf32> -> vector<2x32x128xf32>
    "tpu.trace_stop"() : () -> ()
    %52 = vector.extract_strided_slice %51 {offsets = [0, 0, 42], sizes = [2, 32, 1], strides = [1, 1, 1]} : vector<2x32x128xf32> to vector<2x32x1xf32>
    %53 = tpu.reciprocal %52 {approx = true} : vector<2x32x1xf32> -> vector<2x32x1xf32>
    %54 = vector.broadcast %53 : vector<2x32x1xf32> to vector<2x32x128xf32>
    %55 = arith.mulf %51, %54 : vector<2x32x128xf32>
    %c0_13 = arith.constant 0 : index
    %c0_14 = arith.constant 0 : index
    %c0_15 = arith.constant 0 : index
    %56 = vector.load %arg5[%c0_13, %c0_14, %c0_15] : memref<2x32x128xf32, #tpu.memory_space<vmem>>, vector<2x32x128xf32>
    tpu.vector_store %arg5[%c0_13, %c0_14, %c0_15], %55 {strides = array<i32>} : memref<2x32x128xf32, #tpu.memory_space<vmem>>, vector<2x32x128xf32>,
    return
  }
  func.func @transform_0(%arg0: i32) -> (i32, i32, i32) {
    %c0_i32 = arith.constant 0 : i32
    %c0_i32_0 = arith.constant 0 : i32
    %c0_i32_1 = arith.constant 0 : i32
    return %arg0, %c0_i32, %c0_i32_0 : i32, i32, i32
  }
  func.func @transform_1(%arg0: i32) -> (i32, i32) {
    %c0_i32 = arith.constant 0 : i32
    %c0_i32_0 = arith.constant 0 : i32
    %c0_i32_1 = arith.constant 0 : i32
    return %c0_i32, %c0_i32_0 : i32, i32
  }
  func.func @transform_2(%arg0: i32) -> (i32, i32) {
    %c0_i32 = arith.constant 0 : i32
    %c0_i32_0 = arith.constant 0 : i32
    %c0_i32_1 = arith.constant 0 : i32
    return %c0_i32, %c0_i32_0 : i32, i32
  }
  func.func @transform_3(%arg0: i32) -> (i32, i32) {
    %c0_i32 = arith.constant 0 : i32
    %c0_i32_0 = arith.constant 0 : i32
    %c0_i32_1 = arith.constant 0 : i32
    return %c0_i32, %c0_i32_0 : i32, i32
  }
  func.func @transform_4(%arg0: i32) -> (i32, i32, i32) {
    %c0_i32 = arith.constant 0 : i32
    %c0_i32_0 = arith.constant 0 : i32
    %c0_i32_1 = arith.constant 0 : i32
    return %arg0, %c0_i32, %c0_i32_0 : i32, i32, i32
  }
}

</mosaic_0001>

<llo_original>
// kernel: head_forward.1
$region0: #{head_forward.1}
  #allocation0 [shape = 'u32[]', space=smem, size = 0x4, offset = 0x4, fixed_abs, tag = 'smem constant byte address 0x4 - core index']
  #allocation1 [shape = 'u32[72,128]{1,0:T(1,128)}', space=vmem, size = 0x9000, scoped, tag = 'internal scratch']
  %s0 = inlined_call_operand.hbm [shape: f32[4,32,256], index: 0, kind: input, shape index: {}]
  %s1 = inlined_call_operand.hbm [shape: bf16[256,640], index: 1, kind: input, shape index: {}]
  %s2 = inlined_call_operand.hbm [shape: f32[32,128], index: 2, kind: input, shape index: {}]
  %s3 = inlined_call_operand.hbm [shape: f32[32,128], index: 3, kind: input, shape index: {}]
  %s4 = inlined_call_operand.hbm [shape: f32[4,32,128], index: 4, kind: output, shape index: {}]
  %s5 = sld [smem:[#allocation0]]
  $region65: #{head_forward.1} parent=0
    _
  %s7 = ssub.s32 1, %s5
  %s8 = scalar_select 0, %s7, %s5
  $region1: #{head_forward.1} parent=0
    #allocation2 [shape = 'u8[131072]{0}', space=vmem, size = 0x20000, scoped, tag = 'input window, operand 0']
    #allocation3 [shape = 's32[2]{0}', space=sflag, size = 0x8, scoped, tag = 'scoped memory for head_forward.1']
    #allocation4 [shape = 's32[2]{0}', space=sflag, size = 0x8, scoped, tag = 'scoped memory for head_forward.1']
    #allocation5 [shape = 'u8[327680]{0}', space=vmem, size = 0x50000, scoped, tag = 'input window, operand 1, single buffered']
    #allocation6 [shape = 's32[1]{0}', space=sflag, size = 0x4, scoped, tag = 'scoped memory for head_forward.1']
    #allocation7 [shape = 'u8[16384]{0}', space=vmem, size = 0x4000, scoped, tag = 'input window, operand 2, single buffered']
    #allocation8 [shape = 'u8[16384]{0}', space=vmem, size = 0x4000, scoped, tag = 'input window, operand 3, single buffered']
    #allocation9 [shape = 's32[1]{0}', space=sflag, size = 0x4, scoped, tag = 'scoped memory for head_forward.1']
    #allocation10 [shape = 'u8[65536]{0}', space=vmem, size = 0x10000, scoped, tag = 'output window, operand 0']
    %9 = vsyncpa [#allocation3], 0
    %s10 = scalar_lea.sflag [#allocation3], 1
    %11 = vsyncpa %s10, 0
    %12 = vsyncpa [#allocation6], 0
    %13 = vsyncpa [#allocation9], 0
    %14 = vsyncpa [#allocation4], 0
    %s15 = scalar_lea.sflag [#allocation4], 1
    %16 = vsyncpa %s15, 0
    loop: start=0, step=1, limit=4
    $region2: #{head_forward.1} parent=1 // loop_pre_header
      _
    $region3: #{head_forward.1} parent=1 // loop_header
      %s18 = sphi 0, %s22
      %p19 = scmp.ge.s32.totalorder %s18, 4
      %s28 = sphi 0, %s30
      %s31 = sphi 0, %s28
      %s32 = sphi 0, %s31
      %s48 = sphi 0, %s32
      %s52 = sphi 0, %s52
      %s54 = sphi 0, %s52
      %s55 = sphi 0, %s54
      %s69 = sphi 0, %s55
      %s73 = sphi 0, %s73
      %s75 = sphi 0, %s73
      %s76 = sphi 0, %s75
      %s90 = sphi 0, %s76
      %s94 = sphi 0, %s94
      %s96 = sphi 0, %s94
      %s97 = sphi 0, %s96
      %s111 = sphi 0, %s97
      %s117 = sphi 0, %s119
      %s120 = sphi 0, %s117
      %s121 = sphi 0, %s120
      %s137 = sphi 0, %s121
    $region4: #{head_forward.1} parent=1 // loop_header_branch
      %21 = sbr.rel (%p19) target = $region8
    $region5: #{head_forward.1} parent=1 // loop_body
      %s23 = ssub.s32 %s18, 1
      %s24 = ssub.s32 %s18, 2
      %s25 = sadd.s32 %s18, 1
      %s26 = ssub.s32 %s18, %s25
      %p27 = scmp.eq.s32.totalorder %s26, 0
      %s29 = sadd.s32 %s28, 1
      %s30 = scalar_select %p27, %s28, %s29
      %p33 = pneg %p27
      %p34 = scmp.eq.s32.totalorder %s18, 1
      %p35 = por %p33, %p34
      %p36 = scmp.ne.s32.totalorder %s28, %s31
      %p37 = scmp.eq.s32.totalorder %s18, 0
      %p38 = por %p36, %p37
      %p39 = scmp.ne.s32.totalorder %s28, %s31
      %p40 = scmp.eq.s32.totalorder %s23, 1
      %p41 = por %p39, %p40
      %p42 = scmp.ne.s32.totalorder %s31, %s32
      %p43 = scmp.eq.s32.totalorder %s23, 0
      %p44 = por %p42, %p43
      %p45 = scmp.ne.s32.totalorder %s31, %s32
      %p46 = scmp.eq.s32.totalorder %s24, 1
      %p47 = por %p45, %p46
      %p49 = scmp.ne.s32.totalorder %s32, %s48
      %p50 = scmp.eq.s32.totalorder %s24, 0
      %p51 = por %p49, %p50
      %s53 = sadd.s32 %s52, 1
      %p56 = scmp.eq.s32.totalorder %s18, 1
      %p57 = scmp.ne.s32.totalorder %s52, %s54
      %p58 = scmp.eq.s32.totalorder %s18, 0
      %p59 = por %p57, %p58
      %p60 = scmp.ne.s32.totalorder %s52, %s54
      %p61 = scmp.eq.s32.totalorder %s23, 1
      %p62 = por %p60, %p61
      %p63 = scmp.ne.s32.totalorder %s54, %s55
      %p64 = scmp.eq.s32.totalorder %s23, 0
      %p65 = por %p63, %p64
      %p66 = scmp.ne.s32.totalorder %s54, %s55
      %p67 = scmp.eq.s32.totalorder %s24, 1
      %p68 = por %p66, %p67
      %p70 = scmp.ne.s32.totalorder %s55, %s69
      %p71 = scmp.eq.s32.totalorder %s24, 0
      %p72 = por %p70, %p71
      %s74 = sadd.s32 %s73, 1
      %p77 = scmp.eq.s32.totalorder %s18, 1
      %p78 = scmp.ne.s32.totalorder %s73, %s75
      %p79 = scmp.eq.s32.totalorder %s18, 0
      %p80 = por %p78, %p79
      %p81 = scmp.ne.s32.totalorder %s73, %s75
      %p82 = scmp.eq.s32.totalorder %s23, 1
      %p83 = por %p81, %p82
      %p84 = scmp.ne.s32.totalorder %s75, %s76
      %p85 = scmp.eq.s32.totalorder %s23, 0
      %p86 = por %p84, %p85
      %p87 = scmp.ne.s32.totalorder %s75, %s76
      %p88 = scmp.eq.s32.totalorder %s24, 1
      %p89 = por %p87, %p88
      %p91 = scmp.ne.s32.totalorder %s76, %s90
      %p92 = scmp.eq.s32.totalorder %s24, 0
      %p93 = por %p91, %p92
      %s95 = sadd.s32 %s94, 1
      %p98 = scmp.eq.s32.totalorder %s18, 1
      %p99 = scmp.ne.s32.totalorder %s94, %s96
      %p100 = scmp.eq.s32.totalorder %s18, 0
      %p101 = por %p99, %p100
      %p102 = scmp.ne.s32.totalorder %s94, %s96
      %p103 = scmp.eq.s32.totalorder %s23, 1
      %p104 = por %p102, %p103
      %p105 = scmp.ne.s32.totalorder %s96, %s97
      %p106 = scmp.eq.s32.totalorder %s23, 0
      %p107 = por %p105, %p106
      %p108 = scmp.ne.s32.totalorder %s96, %s97
      %p109 = scmp.eq.s32.totalorder %s24, 1
      %p110 = por %p108, %p109
      %p112 = scmp.ne.s32.totalorder %s97, %s111
      %p113 = scmp.eq.s32.totalorder %s24, 0
      %p114 = por %p112, %p113
      %s115 = ssub.s32 %s18, %s25
      %p116 = scmp.eq.s32.totalorder %s115, 0
      %s118 = sadd.s32 %s117, 1
      %s119 = scalar_select %p116, %s117, %s118
      %p122 = pneg %p116
      %p123 = scmp.eq.s32.totalorder %s18, 1
      %p124 = por %p122, %p123
      %p125 = scmp.ne.s32.totalorder %s117, %s120
      %p126 = scmp.eq.s32.totalorder %s18, 0
      %p127 = por %p125, %p126
      %p128 = scmp.ne.s32.totalorder %s117, %s120
      %p129 = scmp.eq.s32.totalorder %s23, 1
      %p130 = por %p128, %p129
      %p131 = scmp.ne.s32.totalorder %s120, %s121
      %p132 = scmp.eq.s32.totalorder %s23, 0
      %p133 = por %p131, %p132
      %p134 = scmp.ne.s32.totalorder %s120, %s121
      %p135 = scmp.eq.s32.totalorder %s24, 1
      %p136 = por %p134, %p135
      %p138 = scmp.ne.s32.totalorder %s121, %s137
      %p139 = scmp.eq.s32.totalorder %s24, 0
      %p140 = por %p138, %p139
      %p141 = scmp.le.s32.totalorder 1, %s18
      %p142 = scmp.lt.s32.totalorder %s18, 3
      %p143 = pnand %p141, %p142
      %p144 = pneg %p143
      // Predicated region
      $region9: #{head_forward.1} parent=5 // pred_check
        _
      $region10: #{head_forward.1} parent=5 // pred_check_branch
        %146 = sbr.rel (%p143) target = $region12
      $region11: #{head_forward.1} parent=5 // pred_region
        %s147 = ssub.s32 %s18, 1
        // Predicated region
        $region13: #{head_forward.1} parent=11 // pred_check
          %p148 = pneg %p65
        $region14: #{head_forward.1} parent=11 // pred_check_branch
          %150 = sbr.rel (%p148) target = $region16
        $region15: #{head_forward.1} parent=11 // pred_region
          %152 = vsyncadd [#allocation6], 0
          %s153 = sshll.u32 %s1, 4
          %s154 = int_to_ptr.hbm [resolvable:$true] %s153
          %s155 = sshll.u32 [#allocation5], 4
          %s156 = int_to_ptr.vmem [resolvable:$true] %s155
          %161 = dma.hbm_to_vmem [thread:$0]  %s154, 10240, %s156, [#allocation6], 320, 320, 20
        $region16: #{head_forward.1} parent=11 // pred_fallthru
          _
        // Predicated region
        $region17: #{head_forward.1} parent=11 // pred_check
          %p162 = pneg %p86
        $region18: #{head_forward.1} parent=11 // pred_check_branch
          %164 = sbr.rel (%p162) target = $region20
        $region19: #{head_forward.1} parent=11 // pred_region
          %166 = vsyncadd [#allocation6], 0
          %s167 = sshll.u32 %s2, 4
          %s168 = int_to_ptr.hbm [resolvable:$true] %s167
          %s169 = sshll.u32 [#allocation7], 4
          %s170 = int_to_ptr.vmem [resolvable:$true] %s169
          %175 = dma.hbm_to_vmem [thread:$0]  %s168, 512, %s170, [#allocation6], 128, 128, 8
        $region20: #{head_forward.1} parent=11 // pred_fallthru
          _
        // Predicated region
        $region21: #{head_forward.1} parent=11 // pred_check
          %p176 = pneg %p107
        $region22: #{head_forward.1} parent=11 // pred_check_branch
          %178 = sbr.rel (%p176) target = $region24
        $region23: #{head_forward.1} parent=11 // pred_region
          %180 = vsyncadd [#allocation9], 0
          %s181 = sshll.u32 %s3, 4
          %s182 = int_to_ptr.hbm [resolvable:$true] %s181
          %s183 = sshll.u32 [#allocation8], 4
          %s184 = int_to_ptr.vmem [resolvable:$true] %s183
          %189 = dma.hbm_to_vmem [thread:$0]  %s182, 512, %s184, [#allocation9], 128, 128, 8
        $region24: #{head_forward.1} parent=11 // pred_fallthru
          _
      $region12: #{head_forward.1} parent=5 // pred_fallthru
        _
      %p190 = scmp.lt.s32.totalorder %s18, 2
      // Predicated region
      $region25: #{head_forward.1} parent=5 // pred_check
        %p191 = pneg %p190
      $region26: #{head_forward.1} parent=5 // pred_check_branch
        %193 = sbr.rel (%p191) target = $region28
      $region27: #{head_forward.1} parent=5 // pred_region
        // Predicated region
        $region29: #{head_forward.1} parent=27 // pred_check
          %p194 = pneg %p38
        $region30: #{head_forward.1} parent=27 // pred_check_branch
          %196 = sbr.rel (%p194) target = $region32
        $region31: #{head_forward.1} parent=27 // pred_region
          %s197 = sand.u32 %s28, 1
          %s198 = scalar_lea.sflag [#allocation3], %s197
          %s199 = sand.u32 %s28, 1
          %s200 = smul.addr %s199, 128
          %s201 = scalar_lea.vmem [#allocation2], %s200
          %s202 = smul.u32 2, %s18
          %204 = vsyncadd %s198, 0
          %s205 = smul.addr %s202, 8
          %s206 = smul.addr %s205, 8
          %s207 = scalar_lea.hbm %s0, %s206
          %s208 = sshll.u32 %s207, 4
          %s209 = int_to_ptr.hbm [resolvable:$true] %s208
          %s210 = sshll.u32 %s201, 4
          %s211 = int_to_ptr.vmem [resolvable:$true] %s210
          %216 = dma.hbm_to_vmem [thread:$0]  %s209, 2048, %s211, %s198, 256, 256, 16
        $region32: #{head_forward.1} parent=27 // pred_fallthru
          _
      $region28: #{head_forward.1} parent=5 // pred_fallthru
        _
      %p217 = scmp.le.s32.totalorder 1, %s18
      %p218 = scmp.lt.s32.totalorder %s18, 3
      %p219 = pnand %p217, %p218
      %p220 = pneg %p219
      // Predicated region
      $region33: #{head_forward.1} parent=5 // pred_check
        _
      $region34: #{head_forward.1} parent=5 // pred_check_branch
        %222 = sbr.rel (%p219) target = $region36
      $region35: #{head_forward.1} parent=5 // pred_region
        %s223 = ssub.s32 %s18, 1
        %s224 = sand.u32 %s31, 1
        %s225 = scalar_lea.sflag [#allocation3], %s224
        %s226 = sand.u32 %s31, 1
        %s227 = smul.addr %s226, 128
        %s228 = scalar_lea.vmem [#allocation2], %s227
        // Predicated region
        $region37: #{head_forward.1} parent=35 // pred_check
          %p229 = pneg %p44
        $region38: #{head_forward.1} parent=35 // pred_check_branch
          %231 = sbr.rel (%p229) target = $region40
        $region39: #{head_forward.1} parent=35 // pred_region
          %233 = dma.done %s225, 2048
        $region40: #{head_forward.1} parent=35 // pred_fallthru
          _
        // Predicated region
        $region41: #{head_forward.1} parent=35 // pred_check
          %p234 = pneg %p65
        $region42: #{head_forward.1} parent=35 // pred_check_branch
          %236 = sbr.rel (%p234) target = $region44
        $region43: #{head_forward.1} parent=35 // pred_region
          %238 = dma.done [#allocation6], 10240
        $region44: #{head_forward.1} parent=35 // pred_fallthru
          _
        // Predicated region
        $region45: #{head_forward.1} parent=35 // pred_check
          %p239 = pneg %p86
        $region46: #{head_forward.1} parent=35 // pred_check_branch
          %241 = sbr.rel (%p239) target = $region48
        $region47: #{head_forward.1} parent=35 // pred_region
          %243 = dma.done [#allocation6], 512
        $region48: #{head_forward.1} parent=35 // pred_fallthru
          _
        // Predicated region
        $region49: #{head_forward.1} parent=35 // pred_check
          %p244 = pneg %p107
        $region50: #{head_forward.1} parent=35 // pred_check_branch
          %246 = sbr.rel (%p244) target = $region52
        $region51: #{head_forward.1} parent=35 // pred_region
          %248 = dma.done [#allocation9], 512
        $region52: #{head_forward.1} parent=35 // pred_fallthru
          _
        %s249 = sand.u32 %s31, 1
        %s250 = scalar_lea.sflag [#allocation3], %s249
        %s251 = sand.u32 %s31, 1
        %s252 = smul.addr %s251, 128
        %s253 = scalar_lea.vmem [#allocation2], %s252
        %p254 = pneg %p44
        %p255 = pneg %p41
        %p256 = pneg %p65
        %p257 = pneg %p62
        %p258 = pneg %p86
        %p259 = pneg %p83
        %p260 = pneg %p107
        %p261 = pneg %p104
        %p262 = pneg %p133
        %p263 = pneg %p130
        %s264 = sand.u32 %s120, 1
        %s265 = scalar_lea.sflag [#allocation4], %s264
        %s266 = sand.u32 %s120, 1
        %s267 = smul.addr %s266, 64
        %s268 = scalar_lea.vmem [#allocation10], %s267
        %s269 = smul.u32 2, %s23
        %s270 = smul.u32 2, %s23
        %v272 = vld [vmem:[%s228] sm:$0xff]
        %v273 = vld [vmem:[%s228 + $0x8] sm:$0xff]
        %v274 = vld [vmem:[%s228 + $0x10] sm:$0xff]
        %v275 = vld [vmem:[%s228 + $0x18] sm:$0xff]
        %v276 = vld [vmem:[%s228 + $0x20] sm:$0xff]
        %v277 = vld [vmem:[%s228 + $0x28] sm:$0xff]
        %v278 = vld [vmem:[%s228 + $0x30] sm:$0xff]
        %v279 = vld [vmem:[%s228 + $0x38] sm:$0xff]
        %v280 = vld [vmem:[%s228 + $0x40] sm:$0xff]
        %v281 = vld [vmem:[%s228 + $0x48] sm:$0xff]
        %v282 = vld [vmem:[%s228 + $0x50] sm:$0xff]
        %v283 = vld [vmem:[%s228 + $0x58] sm:$0xff]
        %v284 = vld [vmem:[%s228 + $0x60] sm:$0xff]
        %v285 = vld [vmem:[%s228 + $0x68] sm:$0xff]
        %v286 = vld [vmem:[%s228 + $0x70] sm:$0xff]
        %v287 = vld [vmem:[%s228 + $0x78] sm:$0xff]
        %v288 = vpack.c.bf16 %v273, %v272
        %v289 = vpack.c.bf16 %v275, %v274
        %v290 = vpack.c.bf16 %v277, %v276
        %v291 = vpack.c.bf16 %v279, %v278
        %v292 = vpack.c.bf16 %v281, %v280
        %v293 = vpack.c.bf16 %v283, %v282
        %v294 = vpack.c.bf16 %v285, %v284
        %v295 = vpack.c.bf16 %v287, %v286
        %v296 = vld [vmem:[#allocation5] sm:$0xff]
        %v297 = vld [vmem:[#allocation5 + $0x8] sm:$0xff]
        %v298 = vld [vmem:[#allocation5 + $0x10] sm:$0xf]
        %v299 = vld [vmem:[#allocation5 + $0x14] sm:$0xff]
        %v300 = vld [vmem:[#allocation5 + $0x1c] sm:$0xff]
        %v301 = vld [vmem:[#allocation5 + $0x24] sm:$0xf]
        %v302 = vld [vmem:[#allocation5 + $0x28] sm:$0xff]
        %v303 = vld [vmem:[#allocation5 + $0x30] sm:$0xff]
        %v304 = vld [vmem:[#allocation5 + $0x38] sm:$0xf]
        %v305 = vld [vmem:[#allocation5 + $0x3c] sm:$0xff]
        %v306 = vld [vmem:[#allocation5 + $0x44] sm:$0xff]
        %v307 = vld [vmem:[#allocation5 + $0x4c] sm:$0xf]
        %v308 = vld [vmem:[#allocation5 + $0x50] sm:$0xff]
        %v309 = vld [vmem:[#allocation5 + $0x58] sm:$0xff]
        %v310 = vld [vmem:[#allocation5 + $0x60] sm:$0xf]
        %v311 = vld [vmem:[#allocation5 + $0x64] sm:$0xff]
        %v312 = vld [vmem:[#allocation5 + $0x6c] sm:$0xff]
        %v313 = vld [vmem:[#allocation5 + $0x74] sm:$0xf]
        %v314 = vld [vmem:[#allocation5 + $0x78] sm:$0xff]
        %v315 = vld [vmem:[#allocation5 + $0x80] sm:$0xff]
        %v316 = vld [vmem:[#allocation5 + $0x88] sm:$0xf]
        %v317 = vld [vmem:[#allocation5 + $0x8c] sm:$0xff]
        %v318 = vld [vmem:[#allocation5 + $0x94] sm:$0xff]
        %v319 = vld [vmem:[#allocation5 + $0x9c] sm:$0xf]
        %v320 = vld [vmem:[#allocation5 + $0xa0] sm:$0xff]
        %v321 = vld [vmem:[#allocation5 + $0xa8] sm:$0xff]
        %v322 = vld [vmem:[#allocation5 + $0xb0] sm:$0xf]
        %v323 = vld [vmem:[#allocation5 + $0xb4] sm:$0xff]
        %v324 = vld [vmem:[#allocation5 + $0xbc] sm:$0xff]
        %v325 = vld [vmem:[#allocation5 + $0xc4] sm:$0xf]
        %v326 = vld [vmem:[#allocation5 + $0xc8] sm:$0xff]
        %v327 = vld [vmem:[#allocation5 + $0xd0] sm:$0xff]
        %v328 = vld [vmem:[#allocation5 + $0xd8] sm:$0xf]
        %v329 = vld [vmem:[#allocation5 + $0xdc] sm:$0xff]
        %v330 = vld [vmem:[#allocation5 + $0xe4] sm:$0xff]
        %v331 = vld [vmem:[#allocation5 + $0xec] sm:$0xf]
        %v332 = vld [vmem:[#allocation5 + $0xf0] sm:$0xff]
        %v333 = vld [vmem:[#allocation5 + $0xf8] sm:$0xff]
        %v334 = vld [vmem:[#allocation5 + $0x100] sm:$0xf]
        %v335 = vld [vmem:[#allocation5 + $0x104] sm:$0xff]
        %v336 = vld [vmem:[#allocation5 + $0x10c] sm:$0xff]
        %v337 = vld [vmem:[#allocation5 + $0x114] sm:$0xf]
        %v338 = vld [vmem:[#allocation5 + $0x118] sm:$0xff]
        %v339 = vld [vmem:[#allocation5 + $0x120] sm:$0xff]
        %v340 = vld [vmem:[#allocation5 + $0x128] sm:$0xf]
        %v341 = vld [vmem:[#allocation5 + $0x12c] sm:$0xff]
        %v342 = vld [vmem:[#allocation5 + $0x134] sm:$0xff]
        %v343 = vld [vmem:[#allocation5 + $0x13c] sm:$0xf]
        %v344 = vld [vmem:[#allocation5 + $0x140] sm:$0xff]
        %v345 = vld [vmem:[#allocation5 + $0x148] sm:$0xff]
        %v346 = vld [vmem:[#allocation5 + $0x150] sm:$0xf]
        %v347 = vld [vmem:[#allocation5 + $0x154] sm:$0xff]
        %v348 = vld [vmem:[#allocation5 + $0x15c] sm:$0xff]
        %v349 = vld [vmem:[#allocation5 + $0x164] sm:$0xf]
        %v350 = vld [vmem:[#allocation5 + $0x168] sm:$0xff]
        %v351 = vld [vmem:[#allocation5 + $0x170] sm:$0xff]
        %v352 = vld [vmem:[#allocation5 + $0x178] sm:$0xf]
        %v353 = vld [vmem:[#allocation5 + $0x17c] sm:$0xff]
        %v354 = vld [vmem:[#allocation5 + $0x184] sm:$0xff]
        %v355 = vld [vmem:[#allocation5 + $0x18c] sm:$0xf]
        %v356 = vld [vmem:[#allocation5 + $0x190] sm:$0xff]
        %v357 = vld [vmem:[#allocation5 + $0x198] sm:$0xff]
        %v358 = vld [vmem:[#allocation5 + $0x1a0] sm:$0xf]
        %v359 = vld [vmem:[#allocation5 + $0x1a4] sm:$0xff]
        %v360 = vld [vmem:[#allocation5 + $0x1ac] sm:$0xff]
        %v361 = vld [vmem:[#allocation5 + $0x1b4] sm:$0xf]
        %v362 = vld [vmem:[#allocation5 + $0x1b8] sm:$0xff]
        %v363 = vld [vmem:[#allocation5 + $0x1c0] sm:$0xff]
        %v364 = vld [vmem:[#allocation5 + $0x1c8] sm:$0xf]
        %v365 = vld [vmem:[#allocation5 + $0x1cc] sm:$0xff]
        %v366 = vld [vmem:[#allocation5 + $0x1d4] sm:$0xff]
        %v367 = vld [vmem:[#allocation5 + $0x1dc] sm:$0xf]
        %v368 = vld [vmem:[#allocation5 + $0x1e0] sm:$0xff]
        %v369 = vld [vmem:[#allocation5 + $0x1e8] sm:$0xff]
        %v370 = vld [vmem:[#allocation5 + $0x1f0] sm:$0xf]
        %v371 = vld [vmem:[#allocation5 + $0x1f4] sm:$0xff]
        %v372 = vld [vmem:[#allocation5 + $0x1fc] sm:$0xff]
        %v373 = vld [vmem:[#allocation5 + $0x204] sm:$0xf]
        %v374 = vld [vmem:[#allocation5 + $0x208] sm:$0xff]
        %v375 = vld [vmem:[#allocation5 + $0x210] sm:$0xff]
        %v376 = vld [vmem:[#allocation5 + $0x218] sm:$0xf]
        %v377 = vld [vmem:[#allocation5 + $0x21c] sm:$0xff]
        %v378 = vld [vmem:[#allocation5 + $0x224] sm:$0xff]
        %v379 = vld [vmem:[#allocation5 + $0x22c] sm:$0xf]
        %v380 = vld [vmem:[#allocation5 + $0x230] sm:$0xff]
        %v381 = vld [vmem:[#allocation5 + $0x238] sm:$0xff]
        %v382 = vld [vmem:[#allocation5 + $0x240] sm:$0xf]
        %v383 = vld [vmem:[#allocation5 + $0x244] sm:$0xff]
        %v384 = vld [vmem:[#allocation5 + $0x24c] sm:$0xff]
        %v385 = vld [vmem:[#allocation5 + $0x254] sm:$0xf]
        %v386 = vld [vmem:[#allocation5 + $0x258] sm:$0xff]
        %v387 = vld [vmem:[#allocation5 + $0x260] sm:$0xff]
        %v388 = vld [vmem:[#allocation5 + $0x268] sm:$0xf]
        %v389 = vld [vmem:[#allocation5 + $0x26c] sm:$0xff]
        %v390 = vld [vmem:[#allocation5 + $0x274] sm:$0xff]
        %v391 = vld [vmem:[#allocation5 + $0x27c] sm:$0xf]
        %v400 = vunpack.c.l.b16 %v288
        %v401 = vunpack.c.h.b16 %v288
        %v402 = vunpack.c.l.b16 %v289
        %v403 = vunpack.c.h.b16 %v289
        %v404 = vunpack.c.l.b16 %v290
        %v405 = vunpack.c.h.b16 %v290
        %v406 = vunpack.c.l.b16 %v291
        %v407 = vunpack.c.h.b16 %v291
        %v408 = vunpack.c.l.b16 %v292
        %v409 = vunpack.c.h.b16 %v292
        %v410 = vunpack.c.l.b16 %v293
        %v411 = vunpack.c.h.b16 %v293
        %v412 = vunpack.c.l.b16 %v294
        %v413 = vunpack.c.h.b16 %v294
        %v414 = vunpack.c.l.b16 %v295
        %v415 = vunpack.c.h.b16 %v295
        %v416 = vpack.c.b16 %v402, %v400
        %v417 = vpack.c.b16 %v403, %v401
        %v418 = vpack.c.b16 %v406, %v404
        %v419 = vpack.c.b16 %v407, %v405
        %v420 = vpack.c.b16 %v410, %v408
        %v421 = vpack.c.b16 %v411, %v409
        %v422 = vpack.c.b16 %v414, %v412
        %v423 = vpack.c.b16 %v415, %v413
        %v528 = vunpack.c.l.b16 %v296
        %v529 = vunpack.c.h.b16 %v296
        %v530 = vunpack.c.l.b16 %v297
        %v531 = vunpack.c.h.b16 %v297
        %v532 = vunpack.c.l.b16 %v298
        %v533 = vunpack.c.l.b16 %v299
        %v534 = vunpack.c.h.b16 %v299
        %v535 = vunpack.c.l.b16 %v300
        %v536 = vunpack.c.h.b16 %v300
        %v537 = vunpack.c.l.b16 %v301
        %v538 = vunpack.c.l.b16 %v302
        %v539 = vunpack.c.h.b16 %v302
        %v540 = vunpack.c.l.b16 %v303
        %v541 = vunpack.c.h.b16 %v303
        %v542 = vunpack.c.l.b16 %v304
        %v543 = vunpack.c.l.b16 %v305
        %v544 = vunpack.c.h.b16 %v305
        %v545 = vunpack.c.l.b16 %v306
        %v546 = vunpack.c.h.b16 %v306
        %v547 = vunpack.c.l.b16 %v307
        %v548 = vunpack.c.l.b16 %v308
        %v549 = vunpack.c.h.b16 %v308
        %v550 = vunpack.c.l.b16 %v309
        %v551 = vunpack.c.h.b16 %v309
        %v552 = vunpack.c.l.b16 %v310
        %v553 = vunpack.c.l.b16 %v311
        %v554 = vunpack.c.h.b16 %v311
        %v555 = vunpack.c.l.b16 %v312
        %v556 = vunpack.c.h.b16 %v312
        %v557 = vunpack.c.l.b16 %v313
        %v558 = vunpack.c.l.b16 %v314
        %v559 = vunpack.c.h.b16 %v314
        %v560 = vunpack.c.l.b16 %v315
        %v561 = vunpack.c.h.b16 %v315
        %v562 = vunpack.c.l.b16 %v316
        %v563 = vunpack.c.l.b16 %v317
        %v564 = vunpack.c.h.b16 %v317
        %v565 = vunpack.c.l.b16 %v318
        %v566 = vunpack.c.h.b16 %v318
        %v567 = vunpack.c.l.b16 %v319
        %v568 = vunpack.c.l.b16 %v320
        %v569 = vunpack.c.h.b16 %v320
        %v570 = vunpack.c.l.b16 %v321
        %v571 = vunpack.c.h.b16 %v321
        %v572 = vunpack.c.l.b16 %v322
        %v573 = vunpack.c.l.b16 %v323
        %v574 = vunpack.c.h.b16 %v323
        %v575 = vunpack.c.l.b16 %v324
        %v576 = vunpack.c.h.b16 %v324
        %v577 = vunpack.c.l.b16 %v325
        %v578 = vunpack.c.l.b16 %v326
        %v579 = vunpack.c.h.b16 %v326
        %v580 = vunpack.c.l.b16 %v327
        %v581 = vunpack.c.h.b16 %v327
        %v582 = vunpack.c.l.b16 %v328
        %v583 = vunpack.c.l.b16 %v329
        %v584 = vunpack.c.h.b16 %v329
        %v585 = vunpack.c.l.b16 %v330
        %v586 = vunpack.c.h.b16 %v330
        %v587 = vunpack.c.l.b16 %v331
        %v588 = vunpack.c.l.b16 %v332
        %v589 = vunpack.c.h.b16 %v332
        %v590 = vunpack.c.l.b16 %v333
        %v591 = vunpack.c.h.b16 %v333
        %v592 = vunpack.c.l.b16 %v334
        %v593 = vunpack.c.l.b16 %v335
        %v594 = vunpack.c.h.b16 %v335
        %v595 = vunpack.c.l.b16 %v336
        %v596 = vunpack.c.h.b16 %v336
        %v597 = vunpack.c.l.b16 %v337
        %v598 = vunpack.c.l.b16 %v338
        %v599 = vunpack.c.h.b16 %v338
        %v600 = vunpack.c.l.b16 %v339
        %v601 = vunpack.c.h.b16 %v339
        %v602 = vunpack.c.l.b16 %v340
        %v603 = vunpack.c.l.b16 %v341
        %v604 = vunpack.c.h.b16 %v341
        %v605 = vunpack.c.l.b16 %v342
        %v606 = vunpack.c.h.b16 %v342
        %v607 = vunpack.c.l.b16 %v343
        %v608 = vunpack.c.l.b16 %v344
        %v609 = vunpack.c.h.b16 %v344
        %v610 = vunpack.c.l.b16 %v345
        %v611 = vunpack.c.h.b16 %v345
        %v612 = vunpack.c.l.b16 %v346
        %v613 = vunpack.c.l.b16 %v347
        %v614 = vunpack.c.h.b16 %v347
        %v615 = vunpack.c.l.b16 %v348
        %v616 = vunpack.c.h.b16 %v348
        %v617 = vunpack.c.l.b16 %v349
        %v618 = vunpack.c.l.b16 %v350
        %v619 = vunpack.c.h.b16 %v350
        %v620 = vunpack.c.l.b16 %v351
        %v621 = vunpack.c.h.b16 %v351
        %v622 = vunpack.c.l.b16 %v352
        %v623 = vunpack.c.l.b16 %v353
        %v624 = vunpack.c.h.b16 %v353
        %v625 = vunpack.c.l.b16 %v354
        %v626 = vunpack.c.h.b16 %v354
        %v627 = vunpack.c.l.b16 %v355
        %v628 = vunpack.c.l.b16 %v356
        %v629 = vunpack.c.h.b16 %v356
        %v630 = vunpack.c.l.b16 %v357
        %v631 = vunpack.c.h.b16 %v357
        %v632 = vunpack.c.l.b16 %v358
        %v633 = vunpack.c.l.b16 %v359
        %v634 = vunpack.c.h.b16 %v359
        %v635 = vunpack.c.l.b16 %v360
        %v636 = vunpack.c.h.b16 %v360
        %v637 = vunpack.c.l.b16 %v361
        %v638 = vunpack.c.l.b16 %v362
        %v639 = vunpack.c.h.b16 %v362
        %v640 = vunpack.c.l.b16 %v363
        %v641 = vunpack.c.h.b16 %v363
        %v642 = vunpack.c.l.b16 %v364
        %v643 = vunpack.c.l.b16 %v365
        %v644 = vunpack.c.h.b16 %v365
        %v645 = vunpack.c.l.b16 %v366
        %v646 = vunpack.c.h.b16 %v366
        %v647 = vunpack.c.l.b16 %v367
        %v648 = vunpack.c.l.b16 %v368
        %v649 = vunpack.c.h.b16 %v368
        %v650 = vunpack.c.l.b16 %v369
        %v651 = vunpack.c.h.b16 %v369
        %v652 = vunpack.c.l.b16 %v370
        %v653 = vunpack.c.l.b16 %v371
        %v654 = vunpack.c.h.b16 %v371
        %v655 = vunpack.c.l.b16 %v372
        %v656 = vunpack.c.h.b16 %v372
        %v657 = vunpack.c.l.b16 %v373
        %v658 = vunpack.c.l.b16 %v374
        %v659 = vunpack.c.h.b16 %v374
        %v660 = vunpack.c.l.b16 %v375
        %v661 = vunpack.c.h.b16 %v375
        %v662 = vunpack.c.l.b16 %v376
        %v663 = vunpack.c.l.b16 %v377
        %v664 = vunpack.c.h.b16 %v377
        %v665 = vunpack.c.l.b16 %v378
        %v666 = vunpack.c.h.b16 %v378
        %v667 = vunpack.c.l.b16 %v379
        %v668 = vunpack.c.l.b16 %v380
        %v669 = vunpack.c.h.b16 %v380
        %v670 = vunpack.c.l.b16 %v381
        %v671 = vunpack.c.h.b16 %v381
        %v672 = vunpack.c.l.b16 %v382
        %v673 = vunpack.c.l.b16 %v383
        %v674 = vunpack.c.h.b16 %v383
        %v675 = vunpack.c.l.b16 %v384
        %v676 = vunpack.c.h.b16 %v384
        %v677 = vunpack.c.l.b16 %v385
        %v678 = vunpack.c.l.b16 %v386
        %v679 = vunpack.c.h.b16 %v386
        %v680 = vunpack.c.l.b16 %v387
        %v681 = vunpack.c.h.b16 %v387
        %v682 = vunpack.c.l.b16 %v388
        %v683 = vunpack.c.l.b16 %v389
        %v684 = vunpack.c.h.b16 %v389
        %v685 = vunpack.c.l.b16 %v390
        %v686 = vunpack.c.h.b16 %v390
        %v687 = vunpack.c.l.b16 %v391
        %v688 = vpack.c.b16 %v533, %v528
        %v689 = vpack.c.b16 %v534, %v529
        %v690 = vpack.c.b16 %v535, %v530
        %v691 = vpack.c.b16 %v536, %v531
        %v692 = vpack.c.b16 %v537, %v532
        %v693 = vpack.c.b16 %v543, %v538
        %v694 = vpack.c.b16 %v544, %v539
        %v695 = vpack.c.b16 %v545, %v540
        %v696 = vpack.c.b16 %v546, %v541
        %v697 = vpack.c.b16 %v547, %v542
        %v698 = vpack.c.b16 %v553, %v548
        %v699 = vpack.c.b16 %v554, %v549
        %v700 = vpack.c.b16 %v555, %v550
        %v701 = vpack.c.b16 %v556, %v551
        %v702 = vpack.c.b16 %v557, %v552
        %v703 = vpack.c.b16 %v563, %v558
        %v704 = vpack.c.b16 %v564, %v559
        %v705 = vpack.c.b16 %v565, %v560
        %v706 = vpack.c.b16 %v566, %v561
        %v707 = vpack.c.b16 %v567, %v562
        %v708 = vpack.c.b16 %v573, %v568
        %v709 = vpack.c.b16 %v574, %v569
        %v710 = vpack.c.b16 %v575, %v570
        %v711 = vpack.c.b16 %v576, %v571
        %v712 = vpack.c.b16 %v577, %v572
        %v713 = vpack.c.b16 %v583, %v578
        %v714 = vpack.c.b16 %v584, %v579
        %v715 = vpack.c.b16 %v585, %v580
        %v716 = vpack.c.b16 %v586, %v581
        %v717 = vpack.c.b16 %v587, %v582
        %v718 = vpack.c.b16 %v593, %v588
        %v719 = vpack.c.b16 %v594, %v589
        %v720 = vpack.c.b16 %v595, %v590
        %v721 = vpack.c.b16 %v596, %v591
        %v722 = vpack.c.b16 %v597, %v592
        %v723 = vpack.c.b16 %v603, %v598
        %v724 = vpack.c.b16 %v604, %v599
        %v725 = vpack.c.b16 %v605, %v600
        %v726 = vpack.c.b16 %v606, %v601
        %v727 = vpack.c.b16 %v607, %v602
        %v728 = vpack.c.b16 %v613, %v608
        %v729 = vpack.c.b16 %v614, %v609
        %v730 = vpack.c.b16 %v615, %v610
        %v731 = vpack.c.b16 %v616, %v611
        %v732 = vpack.c.b16 %v617, %v612
        %v733 = vpack.c.b16 %v623, %v618
        %v734 = vpack.c.b16 %v624, %v619
        %v735 = vpack.c.b16 %v625, %v620
        %v736 = vpack.c.b16 %v626, %v621
        %v737 = vpack.c.b16 %v627, %v622
        %v738 = vpack.c.b16 %v633, %v628
        %v739 = vpack.c.b16 %v634, %v629
        %v740 = vpack.c.b16 %v635, %v630
        %v741 = vpack.c.b16 %v636, %v631
        %v742 = vpack.c.b16 %v637, %v632
        %v743 = vpack.c.b16 %v643, %v638
        %v744 = vpack.c.b16 %v644, %v639
        %v745 = vpack.c.b16 %v645, %v640
        %v746 = vpack.c.b16 %v646, %v641
        %v747 = vpack.c.b16 %v647, %v642
        %v748 = vpack.c.b16 %v653, %v648
        %v749 = vpack.c.b16 %v654, %v649
        %v750 = vpack.c.b16 %v655, %v650
        %v751 = vpack.c.b16 %v656, %v651
        %v752 = vpack.c.b16 %v657, %v652
        %v753 = vpack.c.b16 %v663, %v658
        %v754 = vpack.c.b16 %v664, %v659
        %v755 = vpack.c.b16 %v665, %v660
        %v756 = vpack.c.b16 %v666, %v661
        %v757 = vpack.c.b16 %v667, %v662
        %v758 = vpack.c.b16 %v673, %v668
        %v759 = vpack.c.b16 %v674, %v669
        %v760 = vpack.c.b16 %v675, %v670
        %v761 = vpack.c.b16 %v676, %v671
        %v762 = vpack.c.b16 %v677, %v672
        %v763 = vpack.c.b16 %v683, %v678
        %v764 = vpack.c.b16 %v684, %v679
        %v765 = vpack.c.b16 %v685, %v680
        %v766 = vpack.c.b16 %v686, %v681
        %v767 = vpack.c.b16 %v687, %v682
        %848 = vmatpush.bf16.msra.mxu0 %v723
        %849 = vmatpush.bf16.msra.mxu0 %v718
        %850 = vmatpush.bf16.msra.mxu0 %v713
        %851 = vmatpush.bf16.msra.mxu0 %v708
        %852 = vmatpush.bf16.msra.mxu0 %v703
        %853 = vmatpush.bf16.msra.mxu0 %v698
        %854 = vmatpush.bf16.msra.mxu0 %v693
        %855 = vmatpush.bf16.msra.mxu0 %v688
        %856 = vmatmul.bf16.gmra.mxu0 %v416
        %v857 = vpop.f32.mrf.mxu0
        %v858 = vadd.f32 0.0, %v857
        %v859 = vpop.f32.mrf.mxu0
        %v860 = vadd.f32 0.0, %v859
        %861 = vmatmul.bf16.gmra.mxu0 %v418
        %v862 = vpop.f32.mrf.mxu0
        %v863 = vadd.f32 0.0, %v862
        %v864 = vpop.f32.mrf.mxu0
        %v865 = vadd.f32 0.0, %v864
        %866 = vmatmul.bf16.gmra.mxu0 %v420
        %v867 = vpop.f32.mrf.mxu0
        %v868 = vadd.f32 0.0, %v867
        %v869 = vpop.f32.mrf.mxu0
        %v870 = vadd.f32 0.0, %v869
        %871 = vmatmul.bf16.gmra.mxu0 %v422
        %v872 = vpop.f32.mrf.mxu0
        %v873 = vadd.f32 0.0, %v872
        %v874 = vpop.f32.mrf.mxu0
        %v875 = vadd.f32 0.0, %v874
        %876 = vdwg.mxu0
        %877 = vmatpush.bf16.msra.mxu0 %v763
        %878 = vmatpush.bf16.msra.mxu0 %v758
        %879 = vmatpush.bf16.msra.mxu0 %v753
        %880 = vmatpush.bf16.msra.mxu0 %v748
        %881 = vmatpush.bf16.msra.mxu0 %v743
        %882 = vmatpush.bf16.msra.mxu0 %v738
        %883 = vmatpush.bf16.msra.mxu0 %v733
        %884 = vmatpush.bf16.msra.mxu0 %v728
        %885 = vmatmul.bf16.gmra.mxu0 %v417
        %v886 = vpop.f32.mrf.mxu0
        %v887 = vadd.f32 %v858, %v886
        %v888 = vpop.f32.mrf.mxu0
        %v889 = vadd.f32 %v860, %v888
        %890 = vmatmul.bf16.gmra.mxu0 %v419
        %v891 = vpop.f32.mrf.mxu0
        %v892 = vadd.f32 %v863, %v891
        %v893 = vpop.f32.mrf.mxu0
        %v894 = vadd.f32 %v865, %v893
        %895 = vmatmul.bf16.gmra.mxu0 %v421
        %v896 = vpop.f32.mrf.mxu0
        %v897 = vadd.f32 %v868, %v896
        %v898 = vpop.f32.mrf.mxu0
        %v899 = vadd.f32 %v870, %v898
        %900 = vmatmul.bf16.gmra.mxu0 %v423
        %v901 = vpop.f32.mrf.mxu0
        %v902 = vadd.f32 %v873, %v901
        %v903 = vpop.f32.mrf.mxu0
        %v904 = vadd.f32 %v875, %v903
        %905 = vdwg.mxu0
        %906 = vmatpush.bf16.msra.mxu0 %v724
        %907 = vmatpush.bf16.msra.mxu0 %v719
        %908 = vmatpush.bf16.msra.mxu0 %v714
        %909 = vmatpush.bf16.msra.mxu0 %v709
        %910 = vmatpush.bf16.msra.mxu0 %v704
        %911 = vmatpush.bf16.msra.mxu0 %v699
        %912 = vmatpush.bf16.msra.mxu0 %v694
        %913 = vmatpush.bf16.msra.mxu0 %v689
        %914 = vmatmul.bf16.gmra.mxu0 %v416
        %v915 = vpop.f32.mrf.mxu0
        %v916 = vadd.f32 0.0, %v915
        %v917 = vpop.f32.mrf.mxu0
        %v918 = vadd.f32 0.0, %v917
        %919 = vmatmul.bf16.gmra.mxu0 %v418
        %v920 = vpop.f32.mrf.mxu0
        %v921 = vadd.f32 0.0, %v920
        %v922 = vpop.f32.mrf.mxu0
        %v923 = vadd.f32 0.0, %v922
        %924 = vmatmul.bf16.gmra.mxu0 %v420
        %v925 = vpop.f32.mrf.mxu0
        %v926 = vadd.f32 0.0, %v925
        %v927 = vpop.f32.mrf.mxu0
        %v928 = vadd.f32 0.0, %v927
        %929 = vmatmul.bf16.gmra.mxu0 %v422
        %v930 = vpop.f32.mrf.mxu0
        %v931 = vadd.f32 0.0, %v930
        %v932 = vpop.f32.mrf.mxu0
        %v933 = vadd.f32 0.0, %v932
        %934 = vdwg.mxu0
        %935 = vmatpush.bf16.msra.mxu0 %v764
        %936 = vmatpush.bf16.msra.mxu0 %v759
        %937 = vmatpush.bf16.msra.mxu0 %v754
        %938 = vmatpush.bf16.msra.mxu0 %v749
        %939 = vmatpush.bf16.msra.mxu0 %v744
        %940 = vmatpush.bf16.msra.mxu0 %v739
        %941 = vmatpush.bf16.msra.mxu0 %v734
        %942 = vmatpush.bf16.msra.mxu0 %v729
        %943 = vmatmul.bf16.gmra.mxu0 %v417
        %v944 = vpop.f32.mrf.mxu0
        %v945 = vadd.f32 %v916, %v944
        %v946 = vpop.f32.mrf.mxu0
        %v947 = vadd.f32 %v918, %v946
        %948 = vmatmul.bf16.gmra.mxu0 %v419
        %v949 = vpop.f32.mrf.mxu0
        %v950 = vadd.f32 %v921, %v949
        %v951 = vpop.f32.mrf.mxu0
        %v952 = vadd.f32 %v923, %v951
        %953 = vmatmul.bf16.gmra.mxu0 %v421
        %v954 = vpop.f32.mrf.mxu0
        %v955 = vadd.f32 %v926, %v954
        %v956 = vpop.f32.mrf.mxu0
        %v957 = vadd.f32 %v928, %v956
        %958 = vmatmul.bf16.gmra.mxu0 %v423
        %v959 = vpop.f32.mrf.mxu0
        %v960 = vadd.f32 %v931, %v959
        %v961 = vpop.f32.mrf.mxu0
        %v962 = vadd.f32 %v933, %v961
        %963 = vdwg.mxu0
        %964 = vmatpush.bf16.msra.mxu0 %v725
        %965 = vmatpush.bf16.msra.mxu0 %v720
        %966 = vmatpush.bf16.msra.mxu0 %v715
        %967 = vmatpush.bf16.msra.mxu0 %v710
        %968 = vmatpush.bf16.msra.mxu0 %v705
        %969 = vmatpush.bf16.msra.mxu0 %v700
        %970 = vmatpush.bf16.msra.mxu0 %v695
        %971 = vmatpush.bf16.msra.mxu0 %v690
        %972 = vmatmul.bf16.gmra.mxu0 %v416
        %v973 = vpop.f32.mrf.mxu0
        %v974 = vadd.f32 0.0, %v973
        %v975 = vpop.f32.mrf.mxu0
        %v976 = vadd.f32 0.0, %v975
        %977 = vmatmul.bf16.gmra.mxu0 %v418
        %v978 = vpop.f32.mrf.mxu0
        %v979 = vadd.f32 0.0, %v978
        %v980 = vpop.f32.mrf.mxu0
        %v981 = vadd.f32 0.0, %v980
        %982 = vmatmul.bf16.gmra.mxu0 %v420
        %v983 = vpop.f32.mrf.mxu0
        %v984 = vadd.f32 0.0, %v983
        %v985 = vpop.f32.mrf.mxu0
        %v986 = vadd.f32 0.0, %v985
        %987 = vmatmul.bf16.gmra.mxu0 %v422
        %v988 = vpop.f32.mrf.mxu0
        %v989 = vadd.f32 0.0, %v988
        %v990 = vpop.f32.mrf.mxu0
        %v991 = vadd.f32 0.0, %v990
        %992 = vdwg.mxu0
        %993 = vmatpush.bf16.msra.mxu0 %v765
        %994 = vmatpush.bf16.msra.mxu0 %v760
        %995 = vmatpush.bf16.msra.mxu0 %v755
        %996 = vmatpush.bf16.msra.mxu0 %v750
        %997 = vmatpush.bf16.msra.mxu0 %v745
        %998 = vmatpush.bf16.msra.mxu0 %v740
        %999 = vmatpush.bf16.msra.mxu0 %v735
        %1000 = vmatpush.bf16.msra.mxu0 %v730
        %1001 = vmatmul.bf16.gmra.mxu0 %v417
        %v1002 = vpop.f32.mrf.mxu0
        %v1003 = vadd.f32 %v974, %v1002
        %v1004 = vpop.f32.mrf.mxu0
        %v1005 = vadd.f32 %v976, %v1004
        %1006 = vmatmul.bf16.gmra.mxu0 %v419
        %v1007 = vpop.f32.mrf.mxu0
        %v1008 = vadd.f32 %v979, %v1007
        %v1009 = vpop.f32.mrf.mxu0
        %v1010 = vadd.f32 %v981, %v1009
        %1011 = vmatmul.bf16.gmra.mxu0 %v421
        %v1012 = vpop.f32.mrf.mxu0
        %v1013 = vadd.f32 %v984, %v1012
        %v1014 = vpop.f32.mrf.mxu0
        %v1015 = vadd.f32 %v986, %v1014
        %1016 = vmatmul.bf16.gmra.mxu0 %v423
        %v1017 = vpop.f32.mrf.mxu0
        %v1018 = vadd.f32 %v989, %v1017
        %v1019 = vpop.f32.mrf.mxu0
        %v1020 = vadd.f32 %v991, %v1019
        %1021 = vdwg.mxu0
        %1022 = vmatpush.bf16.msra.mxu0 %v726
        %1023 = vmatpush.bf16.msra.mxu0 %v721
        %1024 = vmatpush.bf16.msra.mxu0 %v716
        %1025 = vmatpush.bf16.msra.mxu0 %v711
        %1026 = vmatpush.bf16.msra.mxu0 %v706
        %1027 = vmatpush.bf16.msra.mxu0 %v701
        %1028 = vmatpush.bf16.msra.mxu0 %v696
        %1029 = vmatpush.bf16.msra.mxu0 %v691
        %1030 = vmatmul.bf16.gmra.mxu0 %v416
        %v1031 = vpop.f32.mrf.mxu0
        %v1032 = vadd.f32 0.0, %v1031
        %v1033 = vpop.f32.mrf.mxu0
        %v1034 = vadd.f32 0.0, %v1033
        %1035 = vmatmul.bf16.gmra.mxu0 %v418
        %v1036 = vpop.f32.mrf.mxu0
        %v1037 = vadd.f32 0.0, %v1036
        %v1038 = vpop.f32.mrf.mxu0
        %v1039 = vadd.f32 0.0, %v1038
        %1040 = vmatmul.bf16.gmra.mxu0 %v420
        %v1041 = vpop.f32.mrf.mxu0
        %v1042 = vadd.f32 0.0, %v1041
        %v1043 = vpop.f32.mrf.mxu0
        %v1044 = vadd.f32 0.0, %v1043
        %1045 = vmatmul.bf16.gmra.mxu0 %v422
        %v1046 = vpop.f32.mrf.mxu0
        %v1047 = vadd.f32 0.0, %v1046
        %v1048 = vpop.f32.mrf.mxu0
        %v1049 = vadd.f32 0.0, %v1048
        %1050 = vdwg.mxu0
        %1051 = vmatpush.bf16.msra.mxu0 %v766
        %1052 = vmatpush.bf16.msra.mxu0 %v761
        %1053 = vmatpush.bf16.msra.mxu0 %v756
        %1054 = vmatpush.bf16.msra.mxu0 %v751
        %1055 = vmatpush.bf16.msra.mxu0 %v746
        %1056 = vmatpush.bf16.msra.mxu0 %v741
        %1057 = vmatpush.bf16.msra.mxu0 %v736
        %1058 = vmatpush.bf16.msra.mxu0 %v731
        %1059 = vmatmul.bf16.gmra.mxu0 %v417
        %v1060 = vpop.f32.mrf.mxu0
        %v1061 = vadd.f32 %v1032, %v1060
        %v1062 = vpop.f32.mrf.mxu0
        %v1063 = vadd.f32 %v1034, %v1062
        %1064 = vmatmul.bf16.gmra.mxu0 %v419
        %v1065 = vpop.f32.mrf.mxu0
        %v1066 = vadd.f32 %v1037, %v1065
        %v1067 = vpop.f32.mrf.mxu0
        %v1068 = vadd.f32 %v1039, %v1067
        %1069 = vmatmul.bf16.gmra.mxu0 %v421
        %v1070 = vpop.f32.mrf.mxu0
        %v1071 = vadd.f32 %v1042, %v1070
        %v1072 = vpop.f32.mrf.mxu0
        %v1073 = vadd.f32 %v1044, %v1072
        %1074 = vmatmul.bf16.gmra.mxu0 %v423
        %v1075 = vpop.f32.mrf.mxu0
        %v1076 = vadd.f32 %v1047, %v1075
        %v1077 = vpop.f32.mrf.mxu0
        %v1078 = vadd.f32 %v1049, %v1077
        %1079 = vdwg.mxu0
        %1080 = vmatpush.bf16.msra.mxu0 %v727
        %1081 = vmatpush.bf16.msra.mxu0 %v722
        %1082 = vmatpush.bf16.msra.mxu0 %v717
        %1083 = vmatpush.bf16.msra.mxu0 %v712
        %1084 = vmatpush.bf16.msra.mxu0 %v707
        %1085 = vmatpush.bf16.msra.mxu0 %v702
        %1086 = vmatpush.bf16.msra.mxu0 %v697
        %1087 = vmatpush.bf16.msra.mxu0 %v692
        %1088 = vmatmul.bf16.gmra.mxu0 %v416
        %v1089 = vpop.f32.mrf.mxu0
        %v1090 = vadd.f32 0.0, %v1089
        %v1091 = vpop.f32.mrf.mxu0
        %v1092 = vadd.f32 0.0, %v1091
        %1093 = vmatmul.bf16.gmra.mxu0 %v418
        %v1094 = vpop.f32.mrf.mxu0
        %v1095 = vadd.f32 0.0, %v1094
        %v1096 = vpop.f32.mrf.mxu0
        %v1097 = vadd.f32 0.0, %v1096
        %1098 = vmatmul.bf16.gmra.mxu0 %v420
        %v1099 = vpop.f32.mrf.mxu0
        %v1100 = vadd.f32 0.0, %v1099
        %v1101 = vpop.f32.mrf.mxu0
        %v1102 = vadd.f32 0.0, %v1101
        %1103 = vmatmul.bf16.gmra.mxu0 %v422
        %v1104 = vpop.f32.mrf.mxu0
        %v1105 = vadd.f32 0.0, %v1104
        %v1106 = vpop.f32.mrf.mxu0
        %v1107 = vadd.f32 0.0, %v1106
        %1108 = vdwg.mxu0
        %1109 = vmatpush.bf16.msra.mxu0 %v767
        %1110 = vmatpush.bf16.msra.mxu0 %v762
        %1111 = vmatpush.bf16.msra.mxu0 %v757
        %1112 = vmatpush.bf16.msra.mxu0 %v752
        %1113 = vmatpush.bf16.msra.mxu0 %v747
        %1114 = vmatpush.bf16.msra.mxu0 %v742
        %1115 = vmatpush.bf16.msra.mxu0 %v737
        %1116 = vmatpush.bf16.msra.mxu0 %v732
        %1117 = vmatmul.bf16.gmra.mxu0 %v417
        %v1118 = vpop.f32.mrf.mxu0
        %v1119 = vadd.f32 %v1090, %v1118
        %v1120 = vpop.f32.mrf.mxu0
        %v1121 = vadd.f32 %v1092, %v1120
        %1122 = vmatmul.bf16.gmra.mxu0 %v419
        %v1123 = vpop.f32.mrf.mxu0
        %v1124 = vadd.f32 %v1095, %v1123
        %v1125 = vpop.f32.mrf.mxu0
        %v1126 = vadd.f32 %v1097, %v1125
        %1127 = vmatmul.bf16.gmra.mxu0 %v421
        %v1128 = vpop.f32.mrf.mxu0
        %v1129 = vadd.f32 %v1100, %v1128
        %v1130 = vpop.f32.mrf.mxu0
        %v1131 = vadd.f32 %v1102, %v1130
        %1132 = vmatmul.bf16.gmra.mxu0 %v423
        %v1133 = vpop.f32.mrf.mxu0
        %v1134 = vadd.f32 %v1105, %v1133
        %v1135 = vpop.f32.mrf.mxu0
        %v1136 = vadd.f32 %v1107, %v1135
        %1137 = vdwg.mxu0
        %v1138 = vld [vmem:[#allocation7] sm:$0xff]
        %v1139 = vld [vmem:[#allocation7 + $0x8] sm:$0xff]
        %v1140 = vld [vmem:[#allocation7 + $0x10] sm:$0xff]
        %v1141 = vld [vmem:[#allocation7 + $0x18] sm:$0xff]
        %v1142 = vld [vmem:[#allocation8] sm:$0xff]
        %v1143 = vld [vmem:[#allocation8 + $0x8] sm:$0xff]
        %v1144 = vld [vmem:[#allocation8 + $0x10] sm:$0xff]
        %v1145 = vld [vmem:[#allocation8 + $0x18] sm:$0xff]
        %v1146 = vmul.f32 %v887, %v1138
        %v1147 = vmul.f32 %v889, %v1139
        %v1148 = vmul.f32 %v892, %v1140
        %v1149 = vmul.f32 %v894, %v1141
        %v1150 = vmul.f32 %v897, %v1138
        %v1151 = vmul.f32 %v899, %v1139
        %v1152 = vmul.f32 %v902, %v1140
        %v1153 = vmul.f32 %v904, %v1141
        %v1154 = vmul.f32 %v945, %v1142
        %v1155 = vmul.f32 %v947, %v1143
        %v1156 = vmul.f32 %v950, %v1144
        %v1157 = vmul.f32 %v952, %v1145
        %v1158 = vmul.f32 %v955, %v1142
        %v1159 = vmul.f32 %v957, %v1143
        %v1160 = vmul.f32 %v960, %v1144
        %v1161 = vmul.f32 %v962, %v1145
        %v1162 = vadd.f32 %v1146, %v1154
        %v1163 = vadd.f32 %v1147, %v1155
        %v1164 = vadd.f32 %v1148, %v1156
        %v1165 = vadd.f32 %v1149, %v1157
        %v1166 = vadd.f32 %v1150, %v1158
        %v1167 = vadd.f32 %v1151, %v1159
        %v1168 = vadd.f32 %v1152, %v1160
        %v1169 = vadd.f32 %v1153, %v1161
        %v1170 = vmul.f32 %v1003, %v1138
        %v1171 = vmul.f32 %v1005, %v1139
        %v1172 = vmul.f32 %v1008, %v1140
        %v1173 = vmul.f32 %v1010, %v1141
        %v1174 = vmul.f32 %v1013, %v1138
        %v1175 = vmul.f32 %v1015, %v1139
        %v1176 = vmul.f32 %v1018, %v1140
        %v1177 = vmul.f32 %v1020, %v1141
        %v1178 = vmul.f32 %v1061, %v1142
        %v1179 = vmul.f32 %v1063, %v1143
        %v1180 = vmul.f32 %v1066, %v1144
        %v1181 = vmul.f32 %v1068, %v1145
        %v1182 = vmul.f32 %v1071, %v1142
        %v1183 = vmul.f32 %v1073, %v1143
        %v1184 = vmul.f32 %v1076, %v1144
        %v1185 = vmul.f32 %v1078, %v1145
        %v1186 = vadd.f32 %v1170, %v1178
        %v1187 = vadd.f32 %v1171, %v1179
        %v1188 = vadd.f32 %v1172, %v1180
        %v1189 = vadd.f32 %v1173, %v1181
        %v1190 = vadd.f32 %v1174, %v1182
        %v1191 = vadd.f32 %v1175, %v1183
        %v1192 = vadd.f32 %v1176, %v1184
        %v1193 = vadd.f32 %v1177, %v1185
        %v1194 = vpack.c.bf16 %v1162, %v1162
        %v1195 = vpack.c.bf16 %v1163, %v1163
        %v1196 = vpack.c.bf16 %v1164, %v1164
        %v1197 = vpack.c.bf16 %v1165, %v1165
        %v1198 = vpack.c.bf16 %v1166, %v1166
        %v1199 = vpack.c.bf16 %v1167, %v1167
        %v1200 = vpack.c.bf16 %v1168, %v1168
        %v1201 = vpack.c.bf16 %v1169, %v1169
        %v1202 = vpack.c.bf16 %v1186, %v1186
        %v1203 = vpack.c.bf16 %v1187, %v1187
        %v1204 = vpack.c.bf16 %v1188, %v1188
        %v1205 = vpack.c.bf16 %v1189, %v1189
        %v1206 = vpack.c.bf16 %v1190, %v1190
        %v1207 = vpack.c.bf16 %v1191, %v1191
        %v1208 = vpack.c.bf16 %v1192, %v1192
        %v1209 = vpack.c.bf16 %v1193, %v1193
        %v1214 = vunpack.c.l.b16 %v1194
        %v1215 = vunpack.c.l.b16 %v1195
        %v1216 = vunpack.c.l.b16 %v1196
        %v1217 = vunpack.c.l.b16 %v1197
        %v1218 = vpack.c.b16 %v1215, %v1214
        %v1219 = vpack.c.b16 %v1217, %v1216
        %v1226 = vunpack.c.l.b16 %v1202
        %v1227 = vunpack.c.l.b16 %v1203
        %v1228 = vunpack.c.l.b16 %v1204
        %v1229 = vunpack.c.l.b16 %v1205
        %v1230 = vpack.c.b16 %v1227, %v1226
        %v1231 = vpack.c.b16 %v1229, %v1228
        %1234 = vmatpush.bf16.xpose.msra.mxu0 0
        %1235 = vmatpush.bf16.xpose.msra.mxu0 0
        %1236 = vmatpush.bf16.xpose.msra.mxu0 0
        %1237 = vmatpush.bf16.xpose.msra.mxu0 0
        %1238 = vmatpush.bf16.xpose.msra.mxu0 0
        %1239 = vmatpush.bf16.xpose.msra.mxu0 0
        %1240 = vmatpush.bf16.xpose.msra.mxu0 %v1231
        %1241 = vmatpush.bf16.xpose.msra.mxu0 %v1230
        %1242 = vmatmul.bf16.gmra.mxu0 %v1218
        %v1243 = vpop.f32.mrf.mxu0
        %v1244 = vadd.f32 0.0, %v1243
        %v1245 = vpop.f32.mrf.mxu0
        %v1246 = vadd.f32 0.0, %v1245
        %1247 = vmatmul.bf16.gmra.mxu0 %v1219
        %v1248 = vpop.f32.mrf.mxu0
        %v1249 = vadd.f32 0.0, %v1248
        %v1250 = vpop.f32.mrf.mxu0
        %v1251 = vadd.f32 0.0, %v1250
        %1252 = vdwg.mxu0
        %v1257 = vunpack.c.l.b16 %v1198
        %v1258 = vunpack.c.l.b16 %v1199
        %v1259 = vunpack.c.l.b16 %v1200
        %v1260 = vunpack.c.l.b16 %v1201
        %v1261 = vpack.c.b16 %v1258, %v1257
        %v1262 = vpack.c.b16 %v1260, %v1259
        %v1269 = vunpack.c.l.b16 %v1206
        %v1270 = vunpack.c.l.b16 %v1207
        %v1271 = vunpack.c.l.b16 %v1208
        %v1272 = vunpack.c.l.b16 %v1209
        %v1273 = vpack.c.b16 %v1270, %v1269
        %v1274 = vpack.c.b16 %v1272, %v1271
        %1277 = vmatpush.bf16.xpose.msra.mxu0 0
        %1278 = vmatpush.bf16.xpose.msra.mxu0 0
        %1279 = vmatpush.bf16.xpose.msra.mxu0 0
        %1280 = vmatpush.bf16.xpose.msra.mxu0 0
        %1281 = vmatpush.bf16.xpose.msra.mxu0 0
        %1282 = vmatpush.bf16.xpose.msra.mxu0 0
        %1283 = vmatpush.bf16.xpose.msra.mxu0 %v1274
        %1284 = vmatpush.bf16.xpose.msra.mxu0 %v1273
        %1285 = vmatmul.bf16.gmra.mxu0 %v1261
        %v1286 = vpop.f32.mrf.mxu0
        %v1287 = vadd.f32 0.0, %v1286
        %v1288 = vpop.f32.mrf.mxu0
        %v1289 = vadd.f32 0.0, %v1288
        %1290 = vmatmul.bf16.gmra.mxu0 %v1262
        %v1291 = vpop.f32.mrf.mxu0
        %v1292 = vadd.f32 0.0, %v1291
        %v1293 = vpop.f32.mrf.mxu0
        %v1294 = vadd.f32 0.0, %v1293
        %1295 = vdwg.mxu0
        %v1296 = vlaneseq
        %v1297 = vshrl.u32 %v1296, 7
        %v1298 = vadd.s32 %v1297, 8
        %v1299 = vadd.s32 %v1297, 16
        %v1300 = vadd.s32 %v1297, 24
        %v1301 = vlaneseq
        %v1302 = vand.u32 %v1301, 127
        %vm1303 = vcmp.le.s32.totalorder %v1302, %v1297
        %vm1304 = vcmp.le.s32.totalorder %v1302, %v1298
        %vm1305 = vcmp.le.s32.totalorder %v1302, %v1299
        %vm1306 = vcmp.le.s32.totalorder %v1302, %v1300
        %v1307 = vsel %vm1303, 1, 0
        %v1308 = vsel %vm1304, 1, 0
        %v1309 = vsel %vm1305, 1, 0
        %v1310 = vsel %vm1306, 1, 0
        %vm1311 = vcmp.eq.s32.totalorder %v1307, 1
        %vm1312 = vcmp.eq.s32.totalorder %v1308, 1
        %vm1313 = vcmp.eq.s32.totalorder %v1309, 1
        %vm1314 = vcmp.eq.s32.totalorder %v1310, 1
        %v1315 = vsel %vm1311, %v1244, -1e+30
        %v1316 = vsel %vm1312, %v1246, -1e+30
        %v1317 = vsel %vm1313, %v1249, -1e+30
        %v1318 = vsel %vm1314, %v1251, -1e+30
        %v1319 = vsel %vm1311, %v1287, -1e+30
        %v1320 = vsel %vm1312, %v1289, -1e+30
        %v1321 = vsel %vm1313, %v1292, -1e+30
        %v1322 = vsel %vm1314, %v1294, -1e+30
        %vm1323 = vcmask 261120
        %v1324 = vsel %vm1323, %v1315, -inf
        %1325 = vmax.xlane.f32.xlu0 %v1324
        %v1326 = vpop.xlane.xlu0 %1325
        %v1327 = vsel %vm1323, %v1316, -inf
        %1328 = vmax.xlane.f32.xlu0 %v1327
        %v1329 = vpop.xlane.xlu0 %1328
        %v1330 = vsel %vm1323, %v1317, -inf
        %1331 = vmax.xlane.f32.xlu0 %v1330
        %v1332 = vpop.xlane.xlu0 %1331
        %v1333 = vsel %vm1323, %v1318, -inf
        %1334 = vmax.xlane.f32.xlu0 %v1333
        %v1335 = vpop.xlane.xlu0 %1334
        %v1336 = vsel %vm1323, %v1319, -inf
        %1337 = vmax.xlane.f32.xlu0 %v1336
        %v1338 = vpop.xlane.xlu0 %1337
        %v1339 = vsel %vm1323, %v1320, -inf
        %1340 = vmax.xlane.f32.xlu0 %v1339
        %v1341 = vpop.xlane.xlu0 %1340
        %v1342 = vsel %vm1323, %v1321, -inf
        %1343 = vmax.xlane.f32.xlu0 %v1342
        %v1344 = vpop.xlane.xlu0 %1343
        %v1345 = vsel %vm1323, %v1322, -inf
        %1346 = vmax.xlane.f32.xlu0 %v1345
        %v1347 = vpop.xlane.xlu0 %1346
        %v1348 = vsub.f32 %v1315, %v1326
        %v1349 = vsub.f32 %v1316, %v1329
        %v1350 = vsub.f32 %v1317, %v1332
        %v1351 = vsub.f32 %v1318, %v1335
        %v1352 = vsub.f32 %v1319, %v1338
        %v1353 = vsub.f32 %v1320, %v1341
        %v1354 = vsub.f32 %v1321, %v1344
        %v1355 = vsub.f32 %v1322, %v1347
        %v1356 = vmul.f32 %v1348, 1.442695
        %v1357 = vpow.pop %v1356
        %v1358 = vmul.f32 %v1349, 1.442695
        %v1359 = vpow.pop %v1358
        %v1360 = vmul.f32 %v1350, 1.442695
        %v1361 = vpow.pop %v1360
        %v1362 = vmul.f32 %v1351, 1.442695
        %v1363 = vpow.pop %v1362
        %v1364 = vmul.f32 %v1352, 1.442695
        %v1365 = vpow.pop %v1364
        %v1366 = vmul.f32 %v1353, 1.442695
        %v1367 = vpow.pop %v1366
        %v1368 = vmul.f32 %v1354, 1.442695
        %v1369 = vpow.pop %v1368
        %v1370 = vmul.f32 %v1355, 1.442695
        %v1371 = vpow.pop %v1370
        %vm1372 = vcmp.eq.s32.totalorder %v1302, 42
        %v1373 = vsel %vm1372, 1, 0
        %vm1374 = vcmp.eq.s32.totalorder %v1373, 1
        %v1375 = vsel %vm1374, 1.0, %v1119
        %v1376 = vsel %vm1374, 1.0, %v1121
        %v1377 = vsel %vm1374, 1.0, %v1124
        %v1378 = vsel %vm1374, 1.0, %v1126
        %v1379 = vsel %vm1374, 1.0, %v1129
        %v1380 = vsel %vm1374, 1.0, %v1131
        %v1381 = vsel %vm1374, 1.0, %v1134
        %v1382 = vsel %vm1374, 1.0, %v1136
        %v1383 = vpack.c.bf16 %v1357, %v1357
        %v1384 = vpack.c.bf16 %v1359, %v1359
        %v1385 = vpack.c.bf16 %v1361, %v1361
        %v1386 = vpack.c.bf16 %v1363, %v1363
        %v1387 = vpack.c.bf16 %v1365, %v1365
        %v1388 = vpack.c.bf16 %v1367, %v1367
        %v1389 = vpack.c.bf16 %v1369, %v1369
        %v1390 = vpack.c.bf16 %v1371, %v1371
        %v1391 = vpack.c.bf16 %v1375, %v1375
        %v1392 = vpack.c.bf16 %v1376, %v1376
        %v1393 = vpack.c.bf16 %v1377, %v1377
        %v1394 = vpack.c.bf16 %v1378, %v1378
        %v1395 = vpack.c.bf16 %v1379, %v1379
        %v1396 = vpack.c.bf16 %v1380, %v1380
        %v1397 = vpack.c.bf16 %v1381, %v1381
        %v1398 = vpack.c.bf16 %v1382, %v1382
        %v1403 = vunpack.c.l.b16 %v1383
        %v1404 = vunpack.c.l.b16 %v1384
        %v1405 = vunpack.c.l.b16 %v1385
        %v1406 = vunpack.c.l.b16 %v1386
        %v1407 = vpack.c.b16 %v1404, %v1403
        %v1408 = vpack.c.b16 %v1406, %v1405
        %v1413 = vunpack.c.l.b16 %v1391
        %v1414 = vunpack.c.l.b16 %v1392
        %v1415 = vunpack.c.l.b16 %v1393
        %v1416 = vunpack.c.l.b16 %v1394
        %v1417 = vpack.c.b16 %v1414, %v1413
        %v1418 = vpack.c.b16 %v1416, %v1415
        %v1422 = vsel %vm1323, %v1407, 0
        %v1425 = vsel %vm1323, %v1408, 0
        %1427 = vmatpush.bf16.msra.mxu0 0
        %1428 = vmatpush.bf16.msra.mxu0 0
        %1429 = vmatpush.bf16.msra.mxu0 0
        %1430 = vmatpush.bf16.msra.mxu0 0
        %1431 = vmatpush.bf16.msra.mxu0 0
        %1432 = vmatpush.bf16.msra.mxu0 0
        %1433 = vmatpush.bf16.msra.mxu0 %v1418
        %1434 = vmatpush.bf16.msra.mxu0 %v1417
        %1435 = vmatmul.bf16.gmra.mxu0 %v1422
        %v1436 = vpop.f32.mrf.mxu0
        %v1437 = vadd.f32 0.0, %v1436
        %v1438 = vpop.f32.mrf.mxu0
        %v1439 = vadd.f32 0.0, %v1438
        %1440 = vmatmul.bf16.gmra.mxu0 %v1425
        %v1441 = vpop.f32.mrf.mxu0
        %v1442 = vadd.f32 0.0, %v1441
        %v1443 = vpop.f32.mrf.mxu0
        %v1444 = vadd.f32 0.0, %v1443
        %1445 = vdwg.mxu0
        %v1450 = vunpack.c.l.b16 %v1387
        %v1451 = vunpack.c.l.b16 %v1388
        %v1452 = vunpack.c.l.b16 %v1389
        %v1453 = vunpack.c.l.b16 %v1390
        %v1454 = vpack.c.b16 %v1451, %v1450
        %v1455 = vpack.c.b16 %v1453, %v1452
        %v1460 = vunpack.c.l.b16 %v1395
        %v1461 = vunpack.c.l.b16 %v1396
        %v1462 = vunpack.c.l.b16 %v1397
        %v1463 = vunpack.c.l.b16 %v1398
        %v1464 = vpack.c.b16 %v1461, %v1460
        %v1465 = vpack.c.b16 %v1463, %v1462
        %v1469 = vsel %vm1323, %v1454, 0
        %v1472 = vsel %vm1323, %v1455, 0
        %1474 = vmatpush.bf16.msra.mxu0 0
        %1475 = vmatpush.bf16.msra.mxu0 0
        %1476 = vmatpush.bf16.msra.mxu0 0
        %1477 = vmatpush.bf16.msra.mxu0 0
        %1478 = vmatpush.bf16.msra.mxu0 0
        %1479 = vmatpush.bf16.msra.mxu0 0
        %1480 = vmatpush.bf16.msra.mxu0 %v1465
        %1481 = vmatpush.bf16.msra.mxu0 %v1464
        %1482 = vmatmul.bf16.gmra.mxu0 %v1469
        %v1483 = vpop.f32.mrf.mxu0
        %v1484 = vadd.f32 0.0, %v1483
        %v1485 = vpop.f32.mrf.mxu0
        %v1486 = vadd.f32 0.0, %v1485
        %1487 = vmatmul.bf16.gmra.mxu0 %v1472
        %v1488 = vpop.f32.mrf.mxu0
        %v1489 = vadd.f32 0.0, %v1488
        %v1490 = vpop.f32.mrf.mxu0
        %v1491 = vadd.f32 0.0, %v1490
        %1492 = vdwg.mxu0
        %v1493 = vrcp.pop %v1437
        %v1494 = vrcp.pop %v1439
        %v1495 = vrcp.pop %v1442
        %v1496 = vrcp.pop %v1444
        %v1497 = vrcp.pop %v1484
        %v1498 = vrcp.pop %v1486
        %v1499 = vrcp.pop %v1489
        %v1500 = vrcp.pop %v1491
        %1502 = vset.pattern.permute.xlu0 42
        %1503 = vperm.xlu0 %1502, %v1493
        %v1504 = vpop.permute.xlu0 %1503
        %1507 = vset.pattern.permute.xlu0 42
        %1508 = vperm.xlu0 %1507, %v1494
        %v1509 = vpop.permute.xlu0 %1508
        %1512 = vset.pattern.permute.xlu0 42
        %1513 = vperm.xlu0 %1512, %v1495
        %v1514 = vpop.permute.xlu0 %1513
        %1517 = vset.pattern.permute.xlu0 42
        %1518 = vperm.xlu0 %1517, %v1496
        %v1519 = vpop.permute.xlu0 %1518
        %1522 = vset.pattern.permute.xlu0 42
        %1523 = vperm.xlu0 %1522, %v1497
        %v1524 = vpop.permute.xlu0 %1523
        %1527 = vset.pattern.permute.xlu0 42
        %1528 = vperm.xlu0 %1527, %v1498
        %v1529 = vpop.permute.xlu0 %1528
        %1532 = vset.pattern.permute.xlu0 42
        %1533 = vperm.xlu0 %1532, %v1499
        %v1534 = vpop.permute.xlu0 %1533
        %1537 = vset.pattern.permute.xlu0 42
        %1538 = vperm.xlu0 %1537, %v1500
        %v1539 = vpop.permute.xlu0 %1538
        %v1541 = vmul.f32 %v1437, %v1504
        %v1542 = vmul.f32 %v1439, %v1509
        %v1543 = vmul.f32 %v1442, %v1514
        %v1544 = vmul.f32 %v1444, %v1519
        %v1545 = vmul.f32 %v1484, %v1524
        %v1546 = vmul.f32 %v1486, %v1529
        %v1547 = vmul.f32 %v1489, %v1534
        %v1548 = vmul.f32 %v1491, %v1539
        %1549 = vst [vmem:[%s268] sm:$0xff] %v1541
        %1550 = vst [vmem:[%s268 + $0x8] sm:$0xff] %v1542
        %1551 = vst [vmem:[%s268 + $0x10] sm:$0xff] %v1543
        %1552 = vst [vmem:[%s268 + $0x18] sm:$0xff] %v1544
        %1553 = vst [vmem:[%s268 + $0x20] sm:$0xff] %v1545
        %1554 = vst [vmem:[%s268 + $0x28] sm:$0xff] %v1546
        %1555 = vst [vmem:[%s268 + $0x30] sm:$0xff] %v1547
        %1556 = vst [vmem:[%s268 + $0x38] sm:$0xff] %v1548
        %s1557 = sand.u32 %s120, 1
        %s1558 = scalar_lea.sflag [#allocation4], %s1557
        %s1559 = sand.u32 %s120, 1
        %s1560 = smul.addr %s1559, 64
        %s1561 = scalar_lea.vmem [#allocation10], %s1560
        // Predicated region
        $region53: #{head_forward.1} parent=35 // pred_check
          %p1562 = pneg %p130
        $region54: #{head_forward.1} parent=35 // pred_check_branch
          %1564 = sbr.rel (%p1562) target = $region56
        $region55: #{head_forward.1} parent=35 // pred_region
          %s1565 = smul.u32 2, %s23
          %1567 = vsyncadd %s1558, 0
          %s1568 = smul.addr %s1565, 4
          %s1569 = smul.addr %s1568, 8
          %s1570 = scalar_lea.hbm %s4, %s1569
          %s1571 = sshll.u32 %s1561, 4
          %s1572 = int_to_ptr.vmem [resolvable:$true] %s1571
          %s1573 = sshll.u32 %s1570, 4
          %s1574 = int_to_ptr.hbm [resolvable:$true] %s1573
          %1579 = dma.vmem_to_hbm [thread:$0]  %s1572, 1024, %s1574, %s1558, 128, 128, 8
        $region56: #{head_forward.1} parent=35 // pred_fallthru
          _
      $region36: #{head_forward.1} parent=5 // pred_fallthru
        _
      %p1580 = scmp.le.s32.totalorder 2, %s18
      // Predicated region
      $region57: #{head_forward.1} parent=5 // pred_check
        %p1581 = pneg %p1580
      $region58: #{head_forward.1} parent=5 // pred_check_branch
        %1583 = sbr.rel (%p1581) target = $region60
      $region59: #{head_forward.1} parent=5 // pred_region
        %s1584 = ssub.s32 %s18, 2
        // Predicated region
        $region61: #{head_forward.1} parent=59 // pred_check
          %p1585 = pneg %p136
        $region62: #{head_forward.1} parent=59 // pred_check_branch
          %1587 = sbr.rel (%p1585) target = $region64
        $region63: #{head_forward.1} parent=59 // pred_region
          %s1588 = sand.u32 %s121, 1
          %s1589 = scalar_lea.sflag [#allocation4], %s1588
          %s1590 = sand.u32 %s121, 1
          %s1591 = smul.addr %s1590, 64
          %s1592 = scalar_lea.vmem [#allocation10], %s1591
          %1594 = dma.done %s1589, 1024
        $region64: #{head_forward.1} parent=59 // pred_fallthru
          _
      $region60: #{head_forward.1} parent=5 // pred_fallthru
        _
    $region6: #{head_forward.1} parent=1 // loop_footer
      %s22 = sadd.s32 1, %s18
    $region7: #{head_forward.1} parent=1 // loop_footer_branch
      %17 = sbr.rel target = $region3
    $region8: #{head_forward.1} parent=1 // loop_exit
      _
    %1595 = vsyncpa [#allocation3], 1
    %s1596 = scalar_lea.sflag [#allocation3], 1
    %1597 = vsyncpa %s1596, 1
    %1598 = vsyncpa [#allocation6], 1
    %1599 = vsyncpa [#allocation9], 1
    %1600 = vsyncpa [#allocation4], 1
    %s1601 = scalar_lea.sflag [#allocation4], 1
    %1602 = vsyncpa %s1601, 1

</llo_original>
